<compile_context>
chip_gen: v7x
topology: tpu7x:2x2x1
jax: 0.10.0
libtpu: 0.0.40
codegen_flags: <defaults>
</compile_context>

<pallas_src>
import functools

import numpy as np
import jax
import jax.numpy as jnp
from jax.experimental import pallas as pl
from jax.experimental.pallas import tpu as pltpu

LN_EPS = 1e-5  # torch.nn.LayerNorm default


def _make_kernel(N, D, num_heads, norm_before_sum):
    """Build the kernel body; all branching/loops are static (trace-time)."""
    H = num_heads
    hd = D // H

    def kernel(x_ref, w_ref, vec_ref, mask_ref, out_ref):
        x = x_ref[...]                              # (N, D) f32, N = B*S
        # Packed weight slab (pre-transposed at init): [Wqkv^T | Wo^T | Wff^T].
        w_qkv = w_ref[:, 0:3 * D]                   # (D, 3D); q columns pre-scaled
        w_o = w_ref[:, 3 * D:4 * D]                 # (D, D)
        w_ff = w_ref[:, 4 * D:5 * D]                # (D, D)
        # Packed bias / LayerNorm vectors (one DMA instead of seven).
        b_qkv = vec_ref[0:1, :]                     # (1, 3D); q part pre-scaled
        b_o = vec_ref[1:2, 0:D]
        b_ff = vec_ref[2:3, 0:D]
        g1 = vec_ref[3:4, 0:D]
        be1 = vec_ref[4:5, 0:D]
        g2 = vec_ref[5:6, 0:D]
        be2 = vec_ref[6:7, 0:D]
        mask = mask_ref[...]                        # (N, N): 0 on same-batch blocks, -1e30 off

        def layer_norm(v, g, b):
            mu = jnp.mean(v, axis=-1, keepdims=True)
            c = v - mu
            var = jnp.mean(c * c, axis=-1, keepdims=True)
            return c * jax.lax.rsqrt(var + LN_EPS) * g + b       # rsqrt -> EUP

        def attention(v_in):
            # (N, D) @ (D, 3D) on the full batch-fused slab.
            qkv = jnp.dot(v_in, w_qkv,
                          preferred_element_type=jnp.float32) + b_qkv
            # Head-stacked views (H, N, hd); scale already folded into w_qkv/b_qkv.
            q = jnp.stack([qkv[:, h * hd:(h + 1) * hd] for h in range(H)], axis=0)
            k = jnp.stack([qkv[:, D + h * hd:D + (h + 1) * hd] for h in range(H)], axis=0)
            v = jnp.stack([qkv[:, 2 * D + h * hd:2 * D + (h + 1) * hd] for h in range(H)], axis=0)
            # One batched QK^T, one softmax pass, one batched PV.
            s = jnp.einsum("hqd,hkd->hqk", q, k,
                           preferred_element_type=jnp.float32)    # (H, N, N)
            s = s + mask                                          # block-diag batch mask
            s = s - jnp.max(s, axis=-1, keepdims=True)
            p = jnp.exp(s)
            p = p * pl.reciprocal(jnp.sum(p, axis=-1, keepdims=True), approx=True)
            o = jnp.einsum("hqk,hkd->hqd", p, v,
                           preferred_element_type=jnp.float32)    # (H, N, hd)
            # Reassemble heads -> single full-K output projection.
            o = jnp.concatenate([o[h] for h in range(H)], axis=-1)  # (N, D)
            return jnp.dot(o, w_o, preferred_element_type=jnp.float32) + b_o

        if norm_before_sum:
            y = x + attention(layer_norm(x, g1, be1))
            ff = jnp.dot(layer_norm(y, g2, be2), w_ff,
                         preferred_element_type=jnp.float32) + b_ff
            out = y + ff
        else:
            y = layer_norm(x + attention(x), g1, be1)
            ff = jnp.dot(y, w_ff, preferred_element_type=jnp.float32) + b_ff
            out = layer_norm(y + ff, g2, be2)

        out_ref[...] = out.astype(out_ref.dtype)

    return kernel


def prepare_params(params, num_heads):
    """One-time packing/transposition of parameters (hoisted out of the forward path).

    Done in numpy so no per-call XLA transpose/copy ops ever enter the hot path.
    """
    D = params["w_o"].shape[0]
    hd = D // num_heads
    scale = 1.0 / float(np.sqrt(hd))
    # Fold the 1/sqrt(head_dim) query scaling into the in_proj weight / bias.
    row_scale = np.concatenate([np.full((D,), scale, np.float32),
                                np.ones((2 * D,), np.float32)])
    w_qkv = np.asarray(params["w_qkv"], np.float32) * row_scale[:, None]   # (3D, D)
    b_qkv = np.asarray(params["b_qkv"], np.float32) * row_scale            # (3D,)

    w_packed = np.concatenate(
        [w_qkv.T,
         np.asarray(params["w_o"], np.float32).T,
         np.asarray(params["w_ff"], np.float32).T], axis=1)                # (D, 5D)

    vec_packed = np.zeros((8, 3 * D), np.float32)                          # one (8,*) tile
    vec_packed[0, :3 * D] = b_qkv
    vec_packed[1, :D] = np.asarray(params["b_o"], np.float32)
    vec_packed[2, :D] = np.asarray(params["b_ff"], np.float32)
    vec_packed[3, :D] = np.asarray(params["ln1_w"], np.float32)
    vec_packed[4, :D] = np.asarray(params["ln1_b"], np.float32)
    vec_packed[5, :D] = np.asarray(params["ln2_w"], np.float32)
    vec_packed[6, :D] = np.asarray(params["ln2_b"], np.float32)
    return jnp.asarray(w_packed), jnp.asarray(vec_packed)


@functools.partial(jax.jit, static_argnames=("num_heads", "norm_before_sum"))
def transformer_block_forward(x, w_packed, vec_packed, num_heads,
                              norm_before_sum=False):
    """Pallas implementation of TransformerBlock.forward (mask=None)."""
    B, S, D = x.shape
    assert D % num_heads == 0
    N = B * S
    x2 = x.reshape(N, D)                      # free reshape outside the kernel

    # Block-diagonal batch mask: query row i may attend key row j only if they
    # belong to the same batch element (a tiny jit-folded constant).
    bid = np.arange(N) // S
    mask = jnp.asarray(
        np.where(bid[:, None] == bid[None, :], 0.0, -1e30).astype(np.float32))

    kernel = _make_kernel(N, D, num_heads, norm_before_sum)
    out2 = pl.pallas_call(
        kernel,
        out_shape=jax.ShapeDtypeStruct((N, D), x.dtype),
        compiler_params=pltpu.CompilerParams(
            vmem_limit_bytes=32 * 1024 * 1024),   # safe on v5e/v6e/v7x; workload ~1 MiB
    )(x2, w_packed, vec_packed, mask)
    return out2.reshape(B, S, D)


def transformer_block_reference(x, params, num_heads, *, norm_before_sum=False):
    """Pure-JAX reference mirroring the PyTorch forward (for correctness checks)."""
    B, S, D = x.shape
    hd = D // num_heads
    scale = 1.0 / (float(hd) ** 0.5)

    def layer_norm(v, g, b):
        mu = jnp.mean(v, axis=-1, keepdims=True)
        var = jnp.mean((v - mu) ** 2, axis=-1, keepdims=True)
        return (v - mu) * jax.lax.rsqrt(var + LN_EPS) * g + b

    def attention(v_in):
        qkv = v_in @ params["w_qkv"].T + params["b_qkv"]
        q, k, v = jnp.split(qkv, 3, axis=-1)
        q = q.reshape(B, S, num_heads, hd).transpose(0, 2, 1, 3) * scale
        k = k.reshape(B, S, num_heads, hd).transpose(0, 2, 1, 3)
        v = v.reshape(B, S, num_heads, hd).transpose(0, 2, 1, 3)
        s = jnp.einsum("bhqd,bhkd->bhqk", q, k)
        p = jax.nn.softmax(s, axis=-1)
        o = jnp.einsum("bhqk,bhkd->bhqd", p, v)
        o = o.transpose(0, 2, 1, 3).reshape(B, S, D)
        return o @ params["w_o"].T + params["b_o"]

    if norm_before_sum:
        nx = layer_norm(x, params["ln1_w"], params["ln1_b"])
        x = x + attention(nx)
        nx = layer_norm(x, params["ln2_w"], params["ln2_b"])
        x = x + (nx @ params["w_ff"].T + params["b_ff"])
    else:
        x = x + attention(x)
        x = layer_norm(x, params["ln1_w"], params["ln1_b"])
        x = x + (x @ params["w_ff"].T + params["b_ff"])
        x = layer_norm(x, params["ln2_w"], params["ln2_b"])
    return x


if __name__ == "__main__":
    B, S, D, H = 2, 8, 128, 4   # batch, seq, token_size (lane-dense), num_heads

    key = jax.random.PRNGKey(0)
    ks = jax.random.split(key, 12)
    w = 0.05
    params = {
        "w_qkv": jax.random.normal(ks[0], (3 * D, D), jnp.float32) * w,
        "b_qkv": jax.random.normal(ks[1], (3 * D,), jnp.float32) * w,
        "w_o":   jax.random.normal(ks[2], (D, D), jnp.float32) * w,
        "b_o":   jax.random.normal(ks[3], (D,), jnp.float32) * w,
        "w_ff":  jax.random.normal(ks[4], (D, D), jnp.float32) * w,
        "b_ff":  jax.random.normal(ks[5], (D,), jnp.float32) * w,
        "ln1_w": 1.0 + 0.1 * jax.random.normal(ks[6], (D,), jnp.float32),
        "ln1_b": 0.1 * jax.random.normal(ks[7], (D,), jnp.float32),
        "ln2_w": 1.0 + 0.1 * jax.random.normal(ks[8], (D,), jnp.float32),
        "ln2_b": 0.1 * jax.random.normal(ks[9], (D,), jnp.float32),
    }
    x = jax.random.normal(ks[10], (B, S, D), jnp.float32)

    # One-time parameter packing (outside the per-call hot path).
    w_packed, vec_packed = prepare_params(params, H)

    ok = True
    for norm_before_sum in (False, True):
        out = transformer_block_forward(x, w_packed, vec_packed, H,
                                        norm_before_sum=norm_before_sum)
        out = jax.block_until_ready(out)
        ref = transformer_block_reference(x, params, H,
                                          norm_before_sum=norm_before_sum)
        # Tolerance accounts for the EUP approximate reciprocal in the softmax
        # normalisation (~1e-4 relative); real bugs show up orders above this.
        if not jnp.allclose(out, ref, atol=2e-3, rtol=2e-3):
            ok = False
            err = float(jnp.max(jnp.abs(out - ref)))
            print(f"MISMATCH norm_before_sum={norm_before_sum} max_abs_err={err}")

    if ok:
        print("KERNEL_OK")
</pallas_src>

<mosaic_0001>
module attributes {stable_mosaic.version = 11 : i64} {
  func.func @kernel(%arg0: memref<16x128xf32, #tpu.memory_space<vmem>>, %arg1: memref<128x640xf32, #tpu.memory_space<vmem>>, %arg2: memref<8x384xf32, #tpu.memory_space<vmem>>, %arg3: memref<16x16xf32, #tpu.memory_space<vmem>>, %arg4: memref<16x128xf32, #tpu.memory_space<vmem>>) attributes {dimension_semantics = [], scalar_prefetch = 0 : i64, scratch_operands = 0 : i64, tpu.core_type = #tpu.core_type<tc>} {
    %c0 = arith.constant 0 : index
    %c0_0 = arith.constant 0 : index
    %0 = vector.load %arg0[%c0, %c0_0] : memref<16x128xf32, #tpu.memory_space<vmem>>, vector<16x128xf32>
    %c0_1 = arith.constant 0 : index
    %c0_2 = arith.constant 0 : index
    %1 = vector.load %arg1[%c0_1, %c0_2] : memref<128x640xf32, #tpu.memory_space<vmem>>, vector<128x384xf32>
    %c0_3 = arith.constant 0 : index
    %c384 = arith.constant 384 : index
    %2 = vector.load %arg1[%c0_3, %c384] : memref<128x640xf32, #tpu.memory_space<vmem>>, vector<128x128xf32>
    %c0_4 = arith.constant 0 : index
    %c512 = arith.constant 512 : index
    %3 = vector.load %arg1[%c0_4, %c512] : memref<128x640xf32, #tpu.memory_space<vmem>>, vector<128x128xf32>
    %c0_5 = arith.constant 0 : index
    %c0_6 = arith.constant 0 : index
    %4 = vector.load %arg2[%c0_5, %c0_6] : memref<8x384xf32, #tpu.memory_space<vmem>>, vector<1x384xf32>
    %c1 = arith.constant 1 : index
    %c0_7 = arith.constant 0 : index
    %5 = vector.load %arg2[%c1, %c0_7] : memref<8x384xf32, #tpu.memory_space<vmem>>, vector<1x128xf32>
    %c2 = arith.constant 2 : index
    %c0_8 = arith.constant 0 : index
    %6 = vector.load %arg2[%c2, %c0_8] : memref<8x384xf32, #tpu.memory_space<vmem>>, vector<1x128xf32>
    %c3 = arith.constant 3 : index
    %c0_9 = arith.constant 0 : index
    %7 = vector.load %arg2[%c3, %c0_9] : memref<8x384xf32, #tpu.memory_space<vmem>>, vector<1x128xf32>
    %c4 = arith.constant 4 : index
    %c0_10 = arith.constant 0 : index
    %8 = vector.load %arg2[%c4, %c0_10] : memref<8x384xf32, #tpu.memory_space<vmem>>, vector<1x128xf32>
    %c5 = arith.constant 5 : index
    %c0_11 = arith.constant 0 : index
    %9 = vector.load %arg2[%c5, %c0_11] : memref<8x384xf32, #tpu.memory_space<vmem>>, vector<1x128xf32>
    %c6 = arith.constant 6 : index
    %c0_12 = arith.constant 0 : index
    %10 = vector.load %arg2[%c6, %c0_12] : memref<8x384xf32, #tpu.memory_space<vmem>>, vector<1x128xf32>
    %c0_13 = arith.constant 0 : index
    %c0_14 = arith.constant 0 : index
    %11 = vector.load %arg3[%c0_13, %c0_14] : memref<16x16xf32, #tpu.memory_space<vmem>>, vector<16x16xf32>
    %cst = arith.constant dense<0.000000e+00> : vector<16x384xf32>
    %12 = tpu.matmul %0, %1, %cst {dimension_numbers = #tpu.dot_dimension_numbers<[1], [0], [0], [1], [0, 0, 1, 1], [], []>} : vector<16x128xf32>, vector<128x384xf32>, vector<16x384xf32> -> vector<16x384xf32>
    %13 = vector.broadcast %4 : vector<1x384xf32> to vector<16x384xf32>
    %14 = arith.addf %12, %13 : vector<16x384xf32>
    %15 = vector.extract_strided_slice %14 {offsets = [0, 0], sizes = [16, 32], strides = [1, 1]} : vector<16x384xf32> to vector<16x32xf32>
    %16 = vector.extract_strided_slice %14 {offsets = [0, 32], sizes = [16, 32], strides = [1, 1]} : vector<16x384xf32> to vector<16x32xf32>
    %17 = vector.extract_strided_slice %14 {offsets = [0, 64], sizes = [16, 32], strides = [1, 1]} : vector<16x384xf32> to vector<16x32xf32>
    %18 = vector.extract_strided_slice %14 {offsets = [0, 96], sizes = [16, 32], strides = [1, 1]} : vector<16x384xf32> to vector<16x32xf32>
    %19 = vector.shape_cast %15 : vector<16x32xf32> to vector<1x16x32xf32>
    %20 = vector.shape_cast %16 : vector<16x32xf32> to vector<1x16x32xf32>
    %21 = vector.shape_cast %17 : vector<16x32xf32> to vector<1x16x32xf32>
    %22 = vector.shape_cast %18 : vector<16x32xf32> to vector<1x16x32xf32>
    %23 = tpu.concatenate %19, %20, %21, %22 in 0 : vector<1x16x32xf32>, vector<1x16x32xf32>, vector<1x16x32xf32>, vector<1x16x32xf32> -> vector<4x16x32xf32>
    %24 = vector.extract_strided_slice %14 {offsets = [0, 128], sizes = [16, 32], strides = [1, 1]} : vector<16x384xf32> to vector<16x32xf32>
    %25 = vector.extract_strided_slice %14 {offsets = [0, 160], sizes = [16, 32], strides = [1, 1]} : vector<16x384xf32> to vector<16x32xf32>
    %26 = vector.extract_strided_slice %14 {offsets = [0, 192], sizes = [16, 32], strides = [1, 1]} : vector<16x384xf32> to vector<16x32xf32>
    %27 = vector.extract_strided_slice %14 {offsets = [0, 224], sizes = [16, 32], strides = [1, 1]} : vector<16x384xf32> to vector<16x32xf32>
    %28 = vector.shape_cast %24 : vector<16x32xf32> to vector<1x16x32xf32>
    %29 = vector.shape_cast %25 : vector<16x32xf32> to vector<1x16x32xf32>
    %30 = vector.shape_cast %26 : vector<16x32xf32> to vector<1x16x32xf32>
    %31 = vector.shape_cast %27 : vector<16x32xf32> to vector<1x16x32xf32>
    %32 = tpu.concatenate %28, %29, %30, %31 in 0 : vector<1x16x32xf32>, vector<1x16x32xf32>, vector<1x16x32xf32>, vector<1x16x32xf32> -> vector<4x16x32xf32>
    %33 = vector.extract_strided_slice %14 {offsets = [0, 256], sizes = [16, 32], strides = [1, 1]} : vector<16x384xf32> to vector<16x32xf32>
    %34 = vector.extract_strided_slice %14 {offsets = [0, 288], sizes = [16, 32], strides = [1, 1]} : vector<16x384xf32> to vector<16x32xf32>
    %35 = vector.extract_strided_slice %14 {offsets = [0, 320], sizes = [16, 32], strides = [1, 1]} : vector<16x384xf32> to vector<16x32xf32>
    %36 = vector.extract_strided_slice %14 {offsets = [0, 352], sizes = [16, 32], strides = [1, 1]} : vector<16x384xf32> to vector<16x32xf32>
    %37 = vector.shape_cast %33 : vector<16x32xf32> to vector<1x16x32xf32>
    %38 = vector.shape_cast %34 : vector<16x32xf32> to vector<1x16x32xf32>
    %39 = vector.shape_cast %35 : vector<16x32xf32> to vector<1x16x32xf32>
    %40 = vector.shape_cast %36 : vector<16x32xf32> to vector<1x16x32xf32>
    %41 = tpu.concatenate %37, %38, %39, %40 in 0 : vector<1x16x32xf32>, vector<1x16x32xf32>, vector<1x16x32xf32>, vector<1x16x32xf32> -> vector<4x16x32xf32>
    "tpu.trace_start"() <{level = 10 : i32, message = "hqd,hkd->hqk"}> : () -> ()
    %cst_15 = arith.constant dense<0.000000e+00> : vector<4x16x16xf32>
    %42 = tpu.matmul %23, %32, %cst_15 {dimension_numbers = #tpu.dot_dimension_numbers<[2], [2], [1], [1], [0, 0, 0, 1, 1, 1], [0], [0]>} : vector<4x16x32xf32>, vector<4x16x32xf32>, vector<4x16x16xf32> -> vector<4x16x16xf32>
    "tpu.trace_stop"() : () -> ()
    %43 = vector.shape_cast %11 : vector<16x16xf32> to vector<1x16x16xf32>
    %44 = vector.broadcast %43 : vector<1x16x16xf32> to vector<4x16x16xf32>
    %45 = arith.addf %42, %44 : vector<4x16x16xf32>
    %cst_16 = arith.constant dense<0xFF800000> : vector<4x16xf32>
    %46 = vector.multi_reduction <maximumf>, %45, %cst_16 [2] : vector<4x16x16xf32> to vector<4x16xf32>
    %47 = vector.shape_cast %46 : vector<4x16xf32> to vector<4x16x1xf32>
    %48 = vector.broadcast %47 : vector<4x16x1xf32> to vector<4x16x16xf32>
    %49 = arith.subf %45, %48 : vector<4x16x16xf32>
    %50 = math.exp %49 : vector<4x16x16xf32>
    %cst_17 = arith.constant dense<0.000000e+00> : vector<4x16xf32>
    %51 = vector.multi_reduction <add>, %50, %cst_17 [2] : vector<4x16x16xf32> to vector<4x16xf32>
    %52 = vector.shape_cast %51 : vector<4x16xf32> to vector<4x16x1xf32>
    %53 = tpu.reciprocal %52 {approx = true} : vector<4x16x1xf32> -> vector<4x16x1xf32>
    %54 = vector.broadcast %53 : vector<4x16x1xf32> to vector<4x16x16xf32>
    %55 = arith.mulf %50, %54 : vector<4x16x16xf32>
    "tpu.trace_start"() <{level = 10 : i32, message = "hqk,hkd->hqd"}> : () -> ()
    %cst_18 = arith.constant dense<0.000000e+00> : vector<4x16x32xf32>
    %56 = tpu.matmul %55, %41, %cst_18 {dimension_numbers = #tpu.dot_dimension_numbers<[2], [1], [1], [2], [0, 0, 0, 1, 1, 2], [0], [0]>} : vector<4x16x16xf32>, vector<4x16x32xf32>, vector<4x16x32xf32> -> vector<4x16x32xf32>
    "tpu.trace_stop"() : () -> ()
    %57 = vector.extract_strided_slice %56 {offsets = [0, 0, 0], sizes = [1, 16, 32], strides = [1, 1, 1]} : vector<4x16x32xf32> to vector<1x16x32xf32>
    %58 = vector.shape_cast %57 : vector<1x16x32xf32> to vector<16x32xf32>
    %59 = vector.extract_strided_slice %56 {offsets = [1, 0, 0], sizes = [1, 16, 32], strides = [1, 1, 1]} : vector<4x16x32xf32> to vector<1x16x32xf32>
    %60 = vector.shape_cast %59 : vector<1x16x32xf32> to vector<16x32xf32>
    %61 = vector.extract_strided_slice %56 {offsets = [2, 0, 0], sizes = [1, 16, 32], strides = [1, 1, 1]} : vector<4x16x32xf32> to vector<1x16x32xf32>
    %62 = vector.shape_cast %61 : vector<1x16x32xf32> to vector<16x32xf32>
    %63 = vector.extract_strided_slice %56 {offsets = [3, 0, 0], sizes = [1, 16, 32], strides = [1, 1, 1]} : vector<4x16x32xf32> to vector<1x16x32xf32>
    %64 = vector.shape_cast %63 : vector<1x16x32xf32> to vector<16x32xf32>
    %65 = tpu.concatenate %58, %60, %62, %64 in 1 : vector<16x32xf32>, vector<16x32xf32>, vector<16x32xf32>, vector<16x32xf32> -> vector<16x128xf32>
    %cst_19 = arith.constant dense<0.000000e+00> : vector<16x128xf32>
    %66 = tpu.matmul %65, %2, %cst_19 {dimension_numbers = #tpu.dot_dimension_numbers<[1], [0], [0], [1], [0, 0, 1, 1], [], []>} : vector<16x128xf32>, vector<128x128xf32>, vector<16x128xf32> -> vector<16x128xf32>
    %67 = vector.broadcast %5 : vector<1x128xf32> to vector<16x128xf32>
    %68 = arith.addf %66, %67 : vector<16x128xf32>
    %69 = arith.addf %0, %68 : vector<16x128xf32>
    %cst_20 = arith.constant dense<0.000000e+00> : vector<16xf32>
    %70 = vector.multi_reduction <add>, %69, %cst_20 [1] : vector<16x128xf32> to vector<16xf32>
    %71 = vector.shape_cast %70 : vector<16xf32> to vector<16x1xf32>
    %cst_21 = arith.constant 1.280000e+02 : f32
    %72 = vector.broadcast %cst_21 : f32 to vector<16x1xf32>
    %73 = arith.divf %71, %72 : vector<16x1xf32>
    %74 = vector.broadcast %73 : vector<16x1xf32> to vector<16x128xf32>
    %75 = arith.subf %69, %74 : vector<16x128xf32>
    %76 = arith.mulf %75, %75 : vector<16x128xf32>
    %cst_22 = arith.constant dense<0.000000e+00> : vector<16xf32>
    %77 = vector.multi_reduction <add>, %76, %cst_22 [1] : vector<16x128xf32> to vector<16xf32>
    %78 = vector.shape_cast %77 : vector<16xf32> to vector<16x1xf32>
    %cst_23 = arith.constant 1.280000e+02 : f32
    %79 = vector.broadcast %cst_23 : f32 to vector<16x1xf32>
    %80 = arith.divf %78, %79 : vector<16x1xf32>
    %cst_24 = arith.constant 9.99999974E-6 : f32
    %81 = vector.broadcast %cst_24 : f32 to vector<16x1xf32>
    %82 = arith.addf %80, %81 : vector<16x1xf32>
    %83 = math.rsqrt %82 : vector<16x1xf32>
    %84 = vector.broadcast %83 : vector<16x1xf32> to vector<16x128xf32>
    %85 = arith.mulf %75, %84 : vector<16x128xf32>
    %86 = vector.broadcast %7 : vector<1x128xf32> to vector<16x128xf32>
    %87 = arith.mulf %85, %86 : vector<16x128xf32>
    %88 = vector.broadcast %8 : vector<1x128xf32> to vector<16x128xf32>
    %89 = arith.addf %87, %88 : vector<16x128xf32>
    %cst_25 = arith.constant dense<0.000000e+00> : vector<16x128xf32>
    %90 = tpu.matmul %89, %3, %cst_25 {dimension_numbers = #tpu.dot_dimension_numbers<[1], [0], [0], [1], [0, 0, 1, 1], [], []>} : vector<16x128xf32>, vector<128x128xf32>, vector<16x128xf32> -> vector<16x128xf32>
    %91 = vector.broadcast %6 : vector<1x128xf32> to vector<16x128xf32>
    %92 = arith.addf %90, %91 : vector<16x128xf32>
    %93 = arith.addf %89, %92 : vector<16x128xf32>
    %cst_26 = arith.constant dense<0.000000e+00> : vector<16xf32>
    %94 = vector.multi_reduction <add>, %93, %cst_26 [1] : vector<16x128xf32> to vector<16xf32>
    %95 = vector.shape_cast %94 : vector<16xf32> to vector<16x1xf32>
    %cst_27 = arith.constant 1.280000e+02 : f32
    %96 = vector.broadcast %cst_27 : f32 to vector<16x1xf32>
    %97 = arith.divf %95, %96 : vector<16x1xf32>
    %98 = vector.broadcast %97 : vector<16x1xf32> to vector<16x128xf32>
    %99 = arith.subf %93, %98 : vector<16x128xf32>
    %100 = arith.mulf %99, %99 : vector<16x128xf32>
    %cst_28 = arith.constant dense<0.000000e+00> : vector<16xf32>
    %101 = vector.multi_reduction <add>, %100, %cst_28 [1] : vector<16x128xf32> to vector<16xf32>
    %102 = vector.shape_cast %101 : vector<16xf32> to vector<16x1xf32>
    %cst_29 = arith.constant 1.280000e+02 : f32
    %103 = vector.broadcast %cst_29 : f32 to vector<16x1xf32>
    %104 = arith.divf %102, %103 : vector<16x1xf32>
    %cst_30 = arith.constant 9.99999974E-6 : f32
    %105 = vector.broadcast %cst_30 : f32 to vector<16x1xf32>
    %106 = arith.addf %104, %105 : vector<16x1xf32>
    %107 = math.rsqrt %106 : vector<16x1xf32>
    %108 = vector.broadcast %107 : vector<16x1xf32> to vector<16x128xf32>
    %109 = arith.mulf %99, %108 : vector<16x128xf32>
    %110 = vector.broadcast %9 : vector<1x128xf32> to vector<16x128xf32>
    %111 = arith.mulf %109, %110 : vector<16x128xf32>
    %112 = vector.broadcast %10 : vector<1x128xf32> to vector<16x128xf32>
    %113 = arith.addf %111, %112 : vector<16x128xf32>
    %c0_31 = arith.constant 0 : index
    %c0_32 = arith.constant 0 : index
    %114 = vector.load %arg4[%c0_31, %c0_32] : memref<16x128xf32, #tpu.memory_space<vmem>>, vector<16x128xf32>
    tpu.vector_store %arg4[%c0_31, %c0_32], %113 {strides = array<i32>} : memref<16x128xf32, #tpu.memory_space<vmem>>, vector<16x128xf32>,
    return
  }
}

</mosaic_0001>

<llo_original>
// kernel: transformer_block_forward.1
$region0: #{transformer_block_forward.1}
  #allocation0 [shape = 'u32[]', space=smem, size = 0x4, offset = 0x4, fixed_abs, tag = 'smem constant byte address 0x4 - core index']
  #allocation1 [shape = 'u32[144,128]{1,0:T(1,128)}', space=vmem, size = 0x12000, scoped, tag = 'internal scratch']
  %s0 = inlined_call_operand.hbm [shape: f32[16,128], index: 0, kind: input, shape index: {}]
  %s1 = inlined_call_operand.hbm [shape: f32[128,640], index: 1, kind: input, shape index: {}]
  %s2 = inlined_call_operand.hbm [shape: f32[8,384], index: 2, kind: input, shape index: {}]
  %s3 = inlined_call_operand.hbm [shape: f32[16,16], index: 3, kind: input, shape index: {}]
  %s4 = inlined_call_operand.hbm [shape: f32[16,128], index: 4, kind: output, shape index: {}]
  %s5 = sld [smem:[#allocation0]]
  $region42: #{transformer_block_forward.1} parent=0
    _
  %s7 = ssub.s32 1, %s5
  %s8 = scalar_select 0, %s7, %s5
  $region1: #{transformer_block_forward.1} parent=0
    #allocation2 [shape = 'u8[8192]{0}', space=vmem, size = 0x2000, scoped, tag = 'input window, operand 0, single buffered']
    #allocation3 [shape = 's32[1]{0}', space=sflag, size = 0x4, scoped, tag = 'scoped memory for transformer_block_forward.1']
    #allocation4 [shape = 's32[1]{0}', space=sflag, size = 0x4, scoped, tag = 'scoped memory for transformer_block_forward.1']
    #allocation5 [shape = 'u8[327680]{0}', space=vmem, size = 0x50000, scoped, tag = 'input window, operand 1, single buffered']
    #allocation6 [shape = 's32[1]{0}', space=sflag, size = 0x4, scoped, tag = 'scoped memory for transformer_block_forward.1']
    #allocation7 [shape = 'u8[12288]{0}', space=vmem, size = 0x3000, scoped, tag = 'input window, operand 2, single buffered']
    #allocation8 [shape = 'u8[8192]{0}', space=vmem, size = 0x2000, scoped, tag = 'input window, operand 3, single buffered']
    #allocation9 [shape = 's32[1]{0}', space=sflag, size = 0x4, scoped, tag = 'scoped memory for transformer_block_forward.1']
    #allocation10 [shape = 'u8[8192]{0}', space=vmem, size = 0x2000, scoped, tag = 'output window, operand 0, single buffered']
    %9 = vsyncpa [#allocation3], 0
    %10 = vsyncpa [#allocation6], 0
    %11 = vsyncpa [#allocation9], 0
    %12 = vsyncpa [#allocation4], 0
    // Predicated region
    $region2: #{transformer_block_forward.1} parent=1 // pred_check
      _
    $region3: #{transformer_block_forward.1} parent=1 // pred_check_branch
      %14 = sbr.rel (0) target = $region5
    $region4: #{transformer_block_forward.1} parent=1 // pred_region
      %s16 = ssub.s32 256, 256
      %17 = vsyncadd [#allocation3], %s16
      %s18 = sshll.u32 [#allocation2], 4
      %s19 = int_to_ptr.vmem [resolvable:$true] %s18
      %24 = dma.hbm_to_vmem [thread:$0]  %s0, 256, %s19, [#allocation3], 128, 128, 8
    $region5: #{transformer_block_forward.1} parent=1 // pred_fallthru
      _
    // Predicated region
    $region6: #{transformer_block_forward.1} parent=1 // pred_check
      _
    $region7: #{transformer_block_forward.1} parent=1 // pred_check_branch
      %26 = sbr.rel (0) target = $region9
    $region8: #{transformer_block_forward.1} parent=1 // pred_region
      %s28 = ssub.s32 10240, 10240
      %29 = vsyncadd [#allocation6], %s28
      %s30 = sshll.u32 [#allocation5], 4
      %s31 = int_to_ptr.vmem [resolvable:$true] %s30
      %36 = dma.hbm_to_vmem [thread:$0]  %s1, 10240, %s31, [#allocation6], 640, 640, 40
    $region9: #{transformer_block_forward.1} parent=1 // pred_fallthru
      _
    // Predicated region
    $region10: #{transformer_block_forward.1} parent=1 // pred_check
      _
    $region11: #{transformer_block_forward.1} parent=1 // pred_check_branch
      %38 = sbr.rel (0) target = $region13
    $region12: #{transformer_block_forward.1} parent=1 // pred_region
      %s40 = ssub.s32 384, 384
      %41 = vsyncadd [#allocation6], %s40
      %s43 = sshll.u32 [#allocation7], 4
      %s44 = int_to_ptr.vmem [resolvable:$true] %s43
      %46 = dma.hbm_to_vmem [thread:$0]  %s2, 384, %s44, [#allocation6]
    $region13: #{transformer_block_forward.1} parent=1 // pred_fallthru
      _
    // Predicated region
    $region14: #{transformer_block_forward.1} parent=1 // pred_check
      _
    $region15: #{transformer_block_forward.1} parent=1 // pred_check_branch
      %48 = sbr.rel (0) target = $region17
    $region16: #{transformer_block_forward.1} parent=1 // pred_region
      %s50 = ssub.s32 256, 256
      %51 = vsyncadd [#allocation9], %s50
      %s52 = sshll.u32 [#allocation8], 4
      %s53 = int_to_ptr.vmem [resolvable:$true] %s52
      %58 = dma.hbm_to_vmem [thread:$0]  %s3, 256, %s53, [#allocation9], 128, 128, 8
    $region17: #{transformer_block_forward.1} parent=1 // pred_fallthru
      _
    // Predicated region
    $region18: #{transformer_block_forward.1} parent=1 // pred_check
      _
    $region19: #{transformer_block_forward.1} parent=1 // pred_check_branch
      %60 = sbr.rel (0) target = $region21
    $region20: #{transformer_block_forward.1} parent=1 // pred_region
      %61 = dma.done [#allocation3], 256
    $region21: #{transformer_block_forward.1} parent=1 // pred_fallthru
      _
    // Predicated region
    $region22: #{transformer_block_forward.1} parent=1 // pred_check
      _
    $region23: #{transformer_block_forward.1} parent=1 // pred_check_branch
      %63 = sbr.rel (0) target = $region25
    $region24: #{transformer_block_forward.1} parent=1 // pred_region
      %64 = dma.done [#allocation6], 10240
    $region25: #{transformer_block_forward.1} parent=1 // pred_fallthru
      _
    // Predicated region
    $region26: #{transformer_block_forward.1} parent=1 // pred_check
      _
    $region27: #{transformer_block_forward.1} parent=1 // pred_check_branch
      %66 = sbr.rel (0) target = $region29
    $region28: #{transformer_block_forward.1} parent=1 // pred_region
      %67 = dma.done [#allocation6], 384
    $region29: #{transformer_block_forward.1} parent=1 // pred_fallthru
      _
    // Predicated region
    $region30: #{transformer_block_forward.1} parent=1 // pred_check
      _
    $region31: #{transformer_block_forward.1} parent=1 // pred_check_branch
      %69 = sbr.rel (0) target = $region33
    $region32: #{transformer_block_forward.1} parent=1 // pred_region
      %70 = dma.done [#allocation9], 256
    $region33: #{transformer_block_forward.1} parent=1 // pred_fallthru
      _
    %v71 = vld [vmem:[#allocation2] sm:$0xff]
    %v72 = vld [vmem:[#allocation2 + $0x8] sm:$0xff]
    %v73 = vld [vmem:[#allocation5] sm:$0xff]
    %v74 = vld [vmem:[#allocation5 + $0x8] sm:$0xff]
    %v75 = vld [vmem:[#allocation5 + $0x10] sm:$0xff]
    %v76 = vld [vmem:[#allocation5 + $0x28] sm:$0xff]
    %v77 = vld [vmem:[#allocation5 + $0x30] sm:$0xff]
    %v78 = vld [vmem:[#allocation5 + $0x38] sm:$0xff]
    %v79 = vld [vmem:[#allocation5 + $0x50] sm:$0xff]
    %v80 = vld [vmem:[#allocation5 + $0x58] sm:$0xff]
    %v81 = vld [vmem:[#allocation5 + $0x60] sm:$0xff]
    %v82 = vld [vmem:[#allocation5 + $0x78] sm:$0xff]
    %v83 = vld [vmem:[#allocation5 + $0x80] sm:$0xff]
    %v84 = vld [vmem:[#allocation5 + $0x88] sm:$0xff]
    %v85 = vld [vmem:[#allocation5 + $0xa0] sm:$0xff]
    %v86 = vld [vmem:[#allocation5 + $0xa8] sm:$0xff]
    %v87 = vld [vmem:[#allocation5 + $0xb0] sm:$0xff]
    %v88 = vld [vmem:[#allocation5 + $0xc8] sm:$0xff]
    %v89 = vld [vmem:[#allocation5 + $0xd0] sm:$0xff]
    %v90 = vld [vmem:[#allocation5 + $0xd8] sm:$0xff]
    %v91 = vld [vmem:[#allocation5 + $0xf0] sm:$0xff]
    %v92 = vld [vmem:[#allocation5 + $0xf8] sm:$0xff]
    %v93 = vld [vmem:[#allocation5 + $0x100] sm:$0xff]
    %v94 = vld [vmem:[#allocation5 + $0x118] sm:$0xff]
    %v95 = vld [vmem:[#allocation5 + $0x120] sm:$0xff]
    %v96 = vld [vmem:[#allocation5 + $0x128] sm:$0xff]
    %v97 = vld [vmem:[#allocation5 + $0x140] sm:$0xff]
    %v98 = vld [vmem:[#allocation5 + $0x148] sm:$0xff]
    %v99 = vld [vmem:[#allocation5 + $0x150] sm:$0xff]
    %v100 = vld [vmem:[#allocation5 + $0x168] sm:$0xff]
    %v101 = vld [vmem:[#allocation5 + $0x170] sm:$0xff]
    %v102 = vld [vmem:[#allocation5 + $0x178] sm:$0xff]
    %v103 = vld [vmem:[#allocation5 + $0x190] sm:$0xff]
    %v104 = vld [vmem:[#allocation5 + $0x198] sm:$0xff]
    %v105 = vld [vmem:[#allocation5 + $0x1a0] sm:$0xff]
    %v106 = vld [vmem:[#allocation5 + $0x1b8] sm:$0xff]
    %v107 = vld [vmem:[#allocation5 + $0x1c0] sm:$0xff]
    %v108 = vld [vmem:[#allocation5 + $0x1c8] sm:$0xff]
    %v109 = vld [vmem:[#allocation5 + $0x1e0] sm:$0xff]
    %v110 = vld [vmem:[#allocation5 + $0x1e8] sm:$0xff]
    %v111 = vld [vmem:[#allocation5 + $0x1f0] sm:$0xff]
    %v112 = vld [vmem:[#allocation5 + $0x208] sm:$0xff]
    %v113 = vld [vmem:[#allocation5 + $0x210] sm:$0xff]
    %v114 = vld [vmem:[#allocation5 + $0x218] sm:$0xff]
    %v115 = vld [vmem:[#allocation5 + $0x230] sm:$0xff]
    %v116 = vld [vmem:[#allocation5 + $0x238] sm:$0xff]
    %v117 = vld [vmem:[#allocation5 + $0x240] sm:$0xff]
    %v118 = vld [vmem:[#allocation5 + $0x258] sm:$0xff]
    %v119 = vld [vmem:[#allocation5 + $0x260] sm:$0xff]
    %v120 = vld [vmem:[#allocation5 + $0x268] sm:$0xff]
    %v121 = vld [vmem:[#allocation5 + $0x18] sm:$0xff]
    %v122 = vld [vmem:[#allocation5 + $0x40] sm:$0xff]
    %v123 = vld [vmem:[#allocation5 + $0x68] sm:$0xff]
    %v124 = vld [vmem:[#allocation5 + $0x90] sm:$0xff]
    %v125 = vld [vmem:[#allocation5 + $0xb8] sm:$0xff]
    %v126 = vld [vmem:[#allocation5 + $0xe0] sm:$0xff]
    %v127 = vld [vmem:[#allocation5 + $0x108] sm:$0xff]
    %v128 = vld [vmem:[#allocation5 + $0x130] sm:$0xff]
    %v129 = vld [vmem:[#allocation5 + $0x158] sm:$0xff]
    %v130 = vld [vmem:[#allocation5 + $0x180] sm:$0xff]
    %v131 = vld [vmem:[#allocation5 + $0x1a8] sm:$0xff]
    %v132 = vld [vmem:[#allocation5 + $0x1d0] sm:$0xff]
    %v133 = vld [vmem:[#allocation5 + $0x1f8] sm:$0xff]
    %v134 = vld [vmem:[#allocation5 + $0x220] sm:$0xff]
    %v135 = vld [vmem:[#allocation5 + $0x248] sm:$0xff]
    %v136 = vld [vmem:[#allocation5 + $0x270] sm:$0xff]
    %v137 = vld [vmem:[#allocation5 + $0x20] sm:$0xff]
    %v138 = vld [vmem:[#allocation5 + $0x48] sm:$0xff]
    %v139 = vld [vmem:[#allocation5 + $0x70] sm:$0xff]
    %v140 = vld [vmem:[#allocation5 + $0x98] sm:$0xff]
    %v141 = vld [vmem:[#allocation5 + $0xc0] sm:$0xff]
    %v142 = vld [vmem:[#allocation5 + $0xe8] sm:$0xff]
    %v143 = vld [vmem:[#allocation5 + $0x110] sm:$0xff]
    %v144 = vld [vmem:[#allocation5 + $0x138] sm:$0xff]
    %v145 = vld [vmem:[#allocation5 + $0x160] sm:$0xff]
    %v146 = vld [vmem:[#allocation5 + $0x188] sm:$0xff]
    %v147 = vld [vmem:[#allocation5 + $0x1b0] sm:$0xff]
    %v148 = vld [vmem:[#allocation5 + $0x1d8] sm:$0xff]
    %v149 = vld [vmem:[#allocation5 + $0x200] sm:$0xff]
    %v150 = vld [vmem:[#allocation5 + $0x228] sm:$0xff]
    %v151 = vld [vmem:[#allocation5 + $0x250] sm:$0xff]
    %v152 = vld [vmem:[#allocation5 + $0x278] sm:$0xff]
    %v153 = vld [vmem:[#allocation7] ss:$8 sm:$0x7]
    %v154 = vld [vmem:[#allocation7 + $0x1] ss:$0 sm:$0xff]
    %v155 = vld [vmem:[#allocation7 + $0x2] ss:$0 sm:$0xff]
    %v156 = vld [vmem:[#allocation7 + $0x3] ss:$0 sm:$0xff]
    %v157 = vld [vmem:[#allocation7 + $0x4] ss:$0 sm:$0xff]
    %v158 = vld [vmem:[#allocation7 + $0x5] ss:$0 sm:$0xff]
    %v159 = vld [vmem:[#allocation7 + $0x6] ss:$0 sm:$0xff]
    %v160 = vld [vmem:[#allocation8] sm:$0xff]
    %v161 = vld [vmem:[#allocation8 + $0x8] sm:$0xff]
    %v163 = vlaneseq
    %v164 = vshrl.u32 %v163, 7
    %v165 = vsub.s32 0, %v164
    %v166 = vrot.slane %v153, %v165
    %v167 = vlaneseq
    %v168 = vshrl.u32 %v167, 7
    %v169 = vsub.s32 1, %v168
    %v170 = vrot.slane %v153, %v169
    %v171 = vlaneseq
    %v172 = vshrl.u32 %v171, 7
    %v173 = vsub.s32 2, %v172
    %v174 = vrot.slane %v153, %v173
    %178 = vmatprep.subr.mxu0 %v74
    %179 = vmatpush1.msra.mxu0 %v73
    %180 = vmatprep.subr.mxu0 %v77
    %181 = vmatpush1.msra.mxu0 %v76
    %182 = vmatprep.subr.mxu0 %v80
    %183 = vmatpush1.msra.mxu0 %v79
    %184 = vmatprep.subr.mxu0 %v83
    %185 = vmatpush1.msra.mxu0 %v82
    %186 = vmatprep.subr.mxu0 %v86
    %187 = vmatpush1.msra.mxu0 %v85
    %188 = vmatprep.subr.mxu0 %v89
    %189 = vmatpush1.msra.mxu0 %v88
    %190 = vmatprep.subr.mxu0 %v92
    %191 = vmatpush1.msra.mxu0 %v91
    %192 = vmatprep.subr.mxu0 %v95
    %193 = vmatpush1.msra.mxu0 %v94
    %194 = vmatprep.subr.mxu0 %v98
    %195 = vmatpush1.msra.mxu0 %v97
    %196 = vmatprep.subr.mxu0 %v101
    %197 = vmatpush1.msra.mxu0 %v100
    %198 = vmatprep.subr.mxu0 %v104
    %199 = vmatpush1.msra.mxu0 %v103
    %200 = vmatprep.subr.mxu0 %v107
    %201 = vmatpush1.msra.mxu0 %v106
    %202 = vmatprep.subr.mxu0 %v110
    %203 = vmatpush1.msra.mxu0 %v109
    %204 = vmatprep.subr.mxu0 %v113
    %205 = vmatpush1.msra.mxu0 %v112
    %206 = vmatprep.subr.mxu0 %v116
    %207 = vmatpush1.msra.mxu0 %v115
    %208 = vmatprep.subr.mxu0 %v119
    %209 = vmatpush1.msra.mxu0 %v118
    %210 = vmatprep.subr.mxu0 0.0
    %211 = vmatpush1.msra.mxu0 0.0
    %212 = vmatprep.subr.mxu0 0.0
    %213 = vmatpush1.msra.mxu0 0.0
    %214 = vmatprep.subr.mxu0 0.0
    %215 = vmatpush1.msra.mxu0 0.0
    %216 = vmatprep.subr.mxu0 0.0
    %217 = vmatpush1.msra.mxu0 0.0
    %218 = vmatprep.subr.mxu0 0.0
    %219 = vmatpush1.msra.mxu0 0.0
    %220 = vmatprep.subr.mxu0 0.0
    %221 = vmatpush1.msra.mxu0 0.0
    %222 = vmatprep.subr.mxu0 0.0
    %223 = vmatpush1.msra.mxu0 0.0
    %224 = vmatprep.subr.mxu0 0.0
    %225 = vmatpush1.msra.mxu0 0.0
    %226 = vmatprep.subr.mxu0 0.0
    %227 = vmatpush1.msra.mxu0 0.0
    %228 = vmatprep.subr.mxu0 0.0
    %229 = vmatpush1.msra.mxu0 0.0
    %230 = vmatprep.subr.mxu0 0.0
    %231 = vmatpush1.msra.mxu0 0.0
    %232 = vmatprep.subr.mxu0 0.0
    %233 = vmatpush1.msra.mxu0 0.0
    %234 = vmatprep.subr.mxu0 0.0
    %235 = vmatpush1.msra.mxu0 0.0
    %236 = vmatprep.subr.mxu0 0.0
    %237 = vmatpush1.msra.mxu0 0.0
    %238 = vmatprep.subr.mxu0 0.0
    %239 = vmatpush1.msra.mxu0 0.0
    %240 = vmatprep.subr.mxu0 0.0
    %241 = vmatpush1.msra.mxu0 0.0
    %242 = vmatprep.mubr.f32.mxu0 0.0
    %243 = vmatmul.mubr.f32.gmra.mrb[0].mxu0 %v71
    %v244 = vpop.f32.mrb[0].mxu0
    %v245 = vadd.f32 %v166, %v244
    %v246 = vpop.f32.mrb[0].mxu0
    %v247 = vadd.f32 %v170, %v246
    %248 = vmatprep.mubr.f32.mxu0 0.0
    %249 = vmatmul.mubr.f32.gmra.mrb[0].mxu0 %v72
    %v250 = vpop.f32.mrb[0].mxu0
    %v251 = vadd.f32 %v166, %v250
    %v252 = vpop.f32.mrb[0].mxu0
    %v253 = vadd.f32 %v170, %v252
    %254 = vdwg.mxu0
    %255 = vmatprep.subr.mxu0 0.0
    %256 = vmatpush1.msra.mxu0 %v75
    %257 = vmatprep.subr.mxu0 0.0
    %258 = vmatpush1.msra.mxu0 %v78
    %259 = vmatprep.subr.mxu0 0.0
    %260 = vmatpush1.msra.mxu0 %v81
    %261 = vmatprep.subr.mxu0 0.0
    %262 = vmatpush1.msra.mxu0 %v84
    %263 = vmatprep.subr.mxu0 0.0
    %264 = vmatpush1.msra.mxu0 %v87
    %265 = vmatprep.subr.mxu0 0.0
    %266 = vmatpush1.msra.mxu0 %v90
    %267 = vmatprep.subr.mxu0 0.0
    %268 = vmatpush1.msra.mxu0 %v93
    %269 = vmatprep.subr.mxu0 0.0
    %270 = vmatpush1.msra.mxu0 %v96
    %271 = vmatprep.subr.mxu0 0.0
    %272 = vmatpush1.msra.mxu0 %v99
    %273 = vmatprep.subr.mxu0 0.0
    %274 = vmatpush1.msra.mxu0 %v102
    %275 = vmatprep.subr.mxu0 0.0
    %276 = vmatpush1.msra.mxu0 %v105
    %277 = vmatprep.subr.mxu0 0.0
    %278 = vmatpush1.msra.mxu0 %v108
    %279 = vmatprep.subr.mxu0 0.0
    %280 = vmatpush1.msra.mxu0 %v111
    %281 = vmatprep.subr.mxu0 0.0
    %282 = vmatpush1.msra.mxu0 %v114
    %283 = vmatprep.subr.mxu0 0.0
    %284 = vmatpush1.msra.mxu0 %v117
    %285 = vmatprep.subr.mxu0 0.0
    %286 = vmatpush1.msra.mxu0 %v120
    %287 = vmatprep.subr.mxu0 0.0
    %288 = vmatpush1.msra.mxu0 0.0
    %289 = vmatprep.subr.mxu0 0.0
    %290 = vmatpush1.msra.mxu0 0.0
    %291 = vmatprep.subr.mxu0 0.0
    %292 = vmatpush1.msra.mxu0 0.0
    %293 = vmatprep.subr.mxu0 0.0
    %294 = vmatpush1.msra.mxu0 0.0
    %295 = vmatprep.subr.mxu0 0.0
    %296 = vmatpush1.msra.mxu0 0.0
    %297 = vmatprep.subr.mxu0 0.0
    %298 = vmatpush1.msra.mxu0 0.0
    %299 = vmatprep.subr.mxu0 0.0
    %300 = vmatpush1.msra.mxu0 0.0
    %301 = vmatprep.subr.mxu0 0.0
    %302 = vmatpush1.msra.mxu0 0.0
    %303 = vmatprep.subr.mxu0 0.0
    %304 = vmatpush1.msra.mxu0 0.0
    %305 = vmatprep.subr.mxu0 0.0
    %306 = vmatpush1.msra.mxu0 0.0
    %307 = vmatprep.subr.mxu0 0.0
    %308 = vmatpush1.msra.mxu0 0.0
    %309 = vmatprep.subr.mxu0 0.0
    %310 = vmatpush1.msra.mxu0 0.0
    %311 = vmatprep.subr.mxu0 0.0
    %312 = vmatpush1.msra.mxu0 0.0
    %313 = vmatprep.subr.mxu0 0.0
    %314 = vmatpush1.msra.mxu0 0.0
    %315 = vmatprep.subr.mxu0 0.0
    %316 = vmatpush1.msra.mxu0 0.0
    %317 = vmatprep.subr.mxu0 0.0
    %318 = vmatpush1.msra.mxu0 0.0
    %319 = vmatprep.mubr.f32.mxu0 0.0
    %320 = vmatmul.mubr.f32.gmra.mrb[0].mxu0 %v71
    %v321 = vpop.f32.mrb[0].mxu0
    %v322 = vadd.f32 %v174, %v321
    %v323 = vpop.f32.mrb[0].mxu0
    %324 = vmatprep.mubr.f32.mxu0 0.0
    %325 = vmatmul.mubr.f32.gmra.mrb[0].mxu0 %v72
    %v326 = vpop.f32.mrb[0].mxu0
    %v327 = vadd.f32 %v174, %v326
    %v328 = vpop.f32.mrb[0].mxu0
    %329 = vdwg.mxu0
    %332 = vrot.lane.b32.xlu0 %v245, 96
    %v333 = vpop.permute.xlu0 %332
    %334 = vrot.lane.b32.xlu0 %v251, 96
    %v335 = vpop.permute.xlu0 %334
    %336 = vrot.lane.b32.xlu0 %v245, 64
    %v337 = vpop.permute.xlu0 %336
    %338 = vrot.lane.b32.xlu0 %v251, 64
    %v339 = vpop.permute.xlu0 %338
    %340 = vrot.lane.b32.xlu0 %v245, 32
    %v341 = vpop.permute.xlu0 %340
    %342 = vrot.lane.b32.xlu0 %v251, 32
    %v343 = vpop.permute.xlu0 %342
    %346 = vrot.lane.b32.xlu0 %v247, 96
    %v347 = vpop.permute.xlu0 %346
    %348 = vrot.lane.b32.xlu0 %v253, 96
    %v349 = vpop.permute.xlu0 %348
    %350 = vrot.lane.b32.xlu0 %v247, 64
    %v351 = vpop.permute.xlu0 %350
    %352 = vrot.lane.b32.xlu0 %v253, 64
    %v353 = vpop.permute.xlu0 %352
    %354 = vrot.lane.b32.xlu0 %v247, 32
    %v355 = vpop.permute.xlu0 %354
    %356 = vrot.lane.b32.xlu0 %v253, 32
    %v357 = vpop.permute.xlu0 %356
    %360 = vrot.lane.b32.xlu0 %v322, 96
    %v361 = vpop.permute.xlu0 %360
    %362 = vrot.lane.b32.xlu0 %v327, 96
    %v363 = vpop.permute.xlu0 %362
    %366 = vrot.lane.b32.xlu0 %v322, 64
    %v367 = vpop.permute.xlu0 %366
    %368 = vrot.lane.b32.xlu0 %v327, 64
    %v369 = vpop.permute.xlu0 %368
    %372 = vrot.lane.b32.xlu0 %v322, 32
    %v373 = vpop.permute.xlu0 %372
    %374 = vrot.lane.b32.xlu0 %v327, 32
    %v375 = vpop.permute.xlu0 %374
    %vm378 = vcmask 261120
    %v379 = vsel %vm378, %v245, 0
    %v381 = vsel %vm378, %v251, 0
    %v383 = vsel %vm378, %v247, 0
    %v385 = vsel %vm378, %v253, 0
    %387 = vmatprep.subr.mxu0 0.0
    %388 = vmatpush1.xpose.msra.mxu0 %v383
    %389 = vmatprep.subr.mxu0 0.0
    %390 = vmatpush1.xpose.msra.mxu0 %v385
    %391 = vmatprep.subr.mxu0 0.0
    %392 = vmatpush1.xpose.msra.mxu0 0.0
    %393 = vmatprep.subr.mxu0 0.0
    %394 = vmatpush1.xpose.msra.mxu0 0.0
    %395 = vmatprep.subr.mxu0 0.0
    %396 = vmatpush1.xpose.msra.mxu0 0.0
    %397 = vmatprep.subr.mxu0 0.0
    %398 = vmatpush1.xpose.msra.mxu0 0.0
    %399 = vmatprep.subr.mxu0 0.0
    %400 = vmatpush1.xpose.msra.mxu0 0.0
    %401 = vmatprep.subr.mxu0 0.0
    %402 = vmatpush1.xpose.msra.mxu0 0.0
    %403 = vmatprep.subr.mxu0 0.0
    %404 = vmatpush1.xpose.msra.mxu0 0.0
    %405 = vmatprep.subr.mxu0 0.0
    %406 = vmatpush1.xpose.msra.mxu0 0.0
    %407 = vmatprep.subr.mxu0 0.0
    %408 = vmatpush1.xpose.msra.mxu0 0.0
    %409 = vmatprep.subr.mxu0 0.0
    %410 = vmatpush1.xpose.msra.mxu0 0.0
    %411 = vmatprep.subr.mxu0 0.0
    %412 = vmatpush1.xpose.msra.mxu0 0.0
    %413 = vmatprep.subr.mxu0 0.0
    %414 = vmatpush1.xpose.msra.mxu0 0.0
    %415 = vmatprep.subr.mxu0 0.0
    %416 = vmatpush1.xpose.msra.mxu0 0.0
    %417 = vmatprep.subr.mxu0 0.0
    %418 = vmatpush1.xpose.msra.mxu0 0.0
    %419 = vmatprep.subr.mxu0 0.0
    %420 = vmatpush1.xpose.msra.mxu0 0.0
    %421 = vmatprep.subr.mxu0 0.0
    %422 = vmatpush1.xpose.msra.mxu0 0.0
    %423 = vmatprep.subr.mxu0 0.0
    %424 = vmatpush1.xpose.msra.mxu0 0.0
    %425 = vmatprep.subr.mxu0 0.0
    %426 = vmatpush1.xpose.msra.mxu0 0.0
    %427 = vmatprep.subr.mxu0 0.0
    %428 = vmatpush1.xpose.msra.mxu0 0.0
    %429 = vmatprep.subr.mxu0 0.0
    %430 = vmatpush1.xpose.msra.mxu0 0.0
    %431 = vmatprep.subr.mxu0 0.0
    %432 = vmatpush1.xpose.msra.mxu0 0.0
    %433 = vmatprep.subr.mxu0 0.0
    %434 = vmatpush1.xpose.msra.mxu0 0.0
    %435 = vmatprep.subr.mxu0 0.0
    %436 = vmatpush1.xpose.msra.mxu0 0.0
    %437 = vmatprep.subr.mxu0 0.0
    %438 = vmatpush1.xpose.msra.mxu0 0.0
    %439 = vmatprep.subr.mxu0 0.0
    %440 = vmatpush1.xpose.msra.mxu0 0.0
    %441 = vmatprep.subr.mxu0 0.0
    %442 = vmatpush1.xpose.msra.mxu0 0.0
    %443 = vmatprep.subr.mxu0 0.0
    %444 = vmatpush1.xpose.msra.mxu0 0.0
    %445 = vmatprep.subr.mxu0 0.0
    %446 = vmatpush1.xpose.msra.mxu0 0.0
    %447 = vmatprep.subr.mxu0 0.0
    %448 = vmatpush1.xpose.msra.mxu0 0.0
    %449 = vmatprep.subr.mxu0 0.0
    %450 = vmatpush1.xpose.msra.mxu0 0.0
    %451 = vmatprep.mubr.f32.mxu0 0.0
    %452 = vmatmul.mubr.f32.gmra.mrb[0].mxu0 %v379
    %v453 = vpop.f32.mrb[0].mxu0
    %v454 = vadd.f32 %v160, %v453
    %v455 = vpop.f32.mrb[0].mxu0
    %456 = vmatprep.mubr.f32.mxu0 0.0
    %457 = vmatmul.mubr.f32.gmra.mrb[0].mxu0 %v381
    %v458 = vpop.f32.mrb[0].mxu0
    %v459 = vadd.f32 %v161, %v458
    %v460 = vpop.f32.mrb[0].mxu0
    %461 = vdwg.mxu0
    %v462 = vsel %vm378, %v333, 0
    %v464 = vsel %vm378, %v335, 0
    %v466 = vsel %vm378, %v347, 0
    %v468 = vsel %vm378, %v349, 0
    %470 = vmatprep.subr.mxu0 0.0
    %471 = vmatpush1.xpose.msra.mxu0 %v466
    %472 = vmatprep.subr.mxu0 0.0
    %473 = vmatpush1.xpose.msra.mxu0 %v468
    %474 = vmatprep.subr.mxu0 0.0
    %475 = vmatpush1.xpose.msra.mxu0 0.0
    %476 = vmatprep.subr.mxu0 0.0
    %477 = vmatpush1.xpose.msra.mxu0 0.0
    %478 = vmatprep.subr.mxu0 0.0
    %479 = vmatpush1.xpose.msra.mxu0 0.0
    %480 = vmatprep.subr.mxu0 0.0
    %481 = vmatpush1.xpose.msra.mxu0 0.0
    %482 = vmatprep.subr.mxu0 0.0
    %483 = vmatpush1.xpose.msra.mxu0 0.0
    %484 = vmatprep.subr.mxu0 0.0
    %485 = vmatpush1.xpose.msra.mxu0 0.0
    %486 = vmatprep.subr.mxu0 0.0
    %487 = vmatpush1.xpose.msra.mxu0 0.0
    %488 = vmatprep.subr.mxu0 0.0
    %489 = vmatpush1.xpose.msra.mxu0 0.0
    %490 = vmatprep.subr.mxu0 0.0
    %491 = vmatpush1.xpose.msra.mxu0 0.0
    %492 = vmatprep.subr.mxu0 0.0
    %493 = vmatpush1.xpose.msra.mxu0 0.0
    %494 = vmatprep.subr.mxu0 0.0
    %495 = vmatpush1.xpose.msra.mxu0 0.0
    %496 = vmatprep.subr.mxu0 0.0
    %497 = vmatpush1.xpose.msra.mxu0 0.0
    %498 = vmatprep.subr.mxu0 0.0
    %499 = vmatpush1.xpose.msra.mxu0 0.0
    %500 = vmatprep.subr.mxu0 0.0
    %501 = vmatpush1.xpose.msra.mxu0 0.0
    %502 = vmatprep.subr.mxu0 0.0
    %503 = vmatpush1.xpose.msra.mxu0 0.0
    %504 = vmatprep.subr.mxu0 0.0
    %505 = vmatpush1.xpose.msra.mxu0 0.0
    %506 = vmatprep.subr.mxu0 0.0
    %507 = vmatpush1.xpose.msra.mxu0 0.0
    %508 = vmatprep.subr.mxu0 0.0
    %509 = vmatpush1.xpose.msra.mxu0 0.0
    %510 = vmatprep.subr.mxu0 0.0
    %511 = vmatpush1.xpose.msra.mxu0 0.0
    %512 = vmatprep.subr.mxu0 0.0
    %513 = vmatpush1.xpose.msra.mxu0 0.0
    %514 = vmatprep.subr.mxu0 0.0
    %515 = vmatpush1.xpose.msra.mxu0 0.0
    %516 = vmatprep.subr.mxu0 0.0
    %517 = vmatpush1.xpose.msra.mxu0 0.0
    %518 = vmatprep.subr.mxu0 0.0
    %519 = vmatpush1.xpose.msra.mxu0 0.0
    %520 = vmatprep.subr.mxu0 0.0
    %521 = vmatpush1.xpose.msra.mxu0 0.0
    %522 = vmatprep.subr.mxu0 0.0
    %523 = vmatpush1.xpose.msra.mxu0 0.0
    %524 = vmatprep.subr.mxu0 0.0
    %525 = vmatpush1.xpose.msra.mxu0 0.0
    %526 = vmatprep.subr.mxu0 0.0
    %527 = vmatpush1.xpose.msra.mxu0 0.0
    %528 = vmatprep.subr.mxu0 0.0
    %529 = vmatpush1.xpose.msra.mxu0 0.0
    %530 = vmatprep.subr.mxu0 0.0
    %531 = vmatpush1.xpose.msra.mxu0 0.0
    %532 = vmatprep.subr.mxu0 0.0
    %533 = vmatpush1.xpose.msra.mxu0 0.0
    %534 = vmatprep.mubr.f32.mxu0 0.0
    %535 = vmatmul.mubr.f32.gmra.mrb[0].mxu0 %v462
    %v536 = vpop.f32.mrb[0].mxu0
    %v537 = vadd.f32 %v160, %v536
    %v538 = vpop.f32.mrb[0].mxu0
    %539 = vmatprep.mubr.f32.mxu0 0.0
    %540 = vmatmul.mubr.f32.gmra.mrb[0].mxu0 %v464
    %v541 = vpop.f32.mrb[0].mxu0
    %v542 = vadd.f32 %v161, %v541
    %v543 = vpop.f32.mrb[0].mxu0
    %544 = vdwg.mxu0
    %v545 = vsel %vm378, %v337, 0
    %v547 = vsel %vm378, %v339, 0
    %v549 = vsel %vm378, %v351, 0
    %v551 = vsel %vm378, %v353, 0
    %553 = vmatprep.subr.mxu0 0.0
    %554 = vmatpush1.xpose.msra.mxu0 %v549
    %555 = vmatprep.subr.mxu0 0.0
    %556 = vmatpush1.xpose.msra.mxu0 %v551
    %557 = vmatprep.subr.mxu0 0.0
    %558 = vmatpush1.xpose.msra.mxu0 0.0
    %559 = vmatprep.subr.mxu0 0.0
    %560 = vmatpush1.xpose.msra.mxu0 0.0
    %561 = vmatprep.subr.mxu0 0.0
    %562 = vmatpush1.xpose.msra.mxu0 0.0
    %563 = vmatprep.subr.mxu0 0.0
    %564 = vmatpush1.xpose.msra.mxu0 0.0
    %565 = vmatprep.subr.mxu0 0.0
    %566 = vmatpush1.xpose.msra.mxu0 0.0
    %567 = vmatprep.subr.mxu0 0.0
    %568 = vmatpush1.xpose.msra.mxu0 0.0
    %569 = vmatprep.subr.mxu0 0.0
    %570 = vmatpush1.xpose.msra.mxu0 0.0
    %571 = vmatprep.subr.mxu0 0.0
    %572 = vmatpush1.xpose.msra.mxu0 0.0
    %573 = vmatprep.subr.mxu0 0.0
    %574 = vmatpush1.xpose.msra.mxu0 0.0
    %575 = vmatprep.subr.mxu0 0.0
    %576 = vmatpush1.xpose.msra.mxu0 0.0
    %577 = vmatprep.subr.mxu0 0.0
    %578 = vmatpush1.xpose.msra.mxu0 0.0
    %579 = vmatprep.subr.mxu0 0.0
    %580 = vmatpush1.xpose.msra.mxu0 0.0
    %581 = vmatprep.subr.mxu0 0.0
    %582 = vmatpush1.xpose.msra.mxu0 0.0
    %583 = vmatprep.subr.mxu0 0.0
    %584 = vmatpush1.xpose.msra.mxu0 0.0
    %585 = vmatprep.subr.mxu0 0.0
    %586 = vmatpush1.xpose.msra.mxu0 0.0
    %587 = vmatprep.subr.mxu0 0.0
    %588 = vmatpush1.xpose.msra.mxu0 0.0
    %589 = vmatprep.subr.mxu0 0.0
    %590 = vmatpush1.xpose.msra.mxu0 0.0
    %591 = vmatprep.subr.mxu0 0.0
    %592 = vmatpush1.xpose.msra.mxu0 0.0
    %593 = vmatprep.subr.mxu0 0.0
    %594 = vmatpush1.xpose.msra.mxu0 0.0
    %595 = vmatprep.subr.mxu0 0.0
    %596 = vmatpush1.xpose.msra.mxu0 0.0
    %597 = vmatprep.subr.mxu0 0.0
    %598 = vmatpush1.xpose.msra.mxu0 0.0
    %599 = vmatprep.subr.mxu0 0.0
    %600 = vmatpush1.xpose.msra.mxu0 0.0
    %601 = vmatprep.subr.mxu0 0.0
    %602 = vmatpush1.xpose.msra.mxu0 0.0
    %603 = vmatprep.subr.mxu0 0.0
    %604 = vmatpush1.xpose.msra.mxu0 0.0
    %605 = vmatprep.subr.mxu0 0.0
    %606 = vmatpush1.xpose.msra.mxu0 0.0
    %607 = vmatprep.subr.mxu0 0.0
    %608 = vmatpush1.xpose.msra.mxu0 0.0
    %609 = vmatprep.subr.mxu0 0.0
    %610 = vmatpush1.xpose.msra.mxu0 0.0
    %611 = vmatprep.subr.mxu0 0.0
    %612 = vmatpush1.xpose.msra.mxu0 0.0
    %613 = vmatprep.subr.mxu0 0.0
    %614 = vmatpush1.xpose.msra.mxu0 0.0
    %615 = vmatprep.subr.mxu0 0.0
    %616 = vmatpush1.xpose.msra.mxu0 0.0
    %617 = vmatprep.mubr.f32.mxu0 0.0
    %618 = vmatmul.mubr.f32.gmra.mrb[0].mxu0 %v545
    %v619 = vpop.f32.mrb[0].mxu0
    %v620 = vadd.f32 %v160, %v619
    %v621 = vpop.f32.mrb[0].mxu0
    %622 = vmatprep.mubr.f32.mxu0 0.0
    %623 = vmatmul.mubr.f32.gmra.mrb[0].mxu0 %v547
    %v624 = vpop.f32.mrb[0].mxu0
    %v625 = vadd.f32 %v161, %v624
    %v626 = vpop.f32.mrb[0].mxu0
    %627 = vdwg.mxu0
    %v628 = vsel %vm378, %v341, 0
    %v630 = vsel %vm378, %v343, 0
    %v632 = vsel %vm378, %v355, 0
    %v634 = vsel %vm378, %v357, 0
    %636 = vmatprep.subr.mxu0 0.0
    %637 = vmatpush1.xpose.msra.mxu0 %v632
    %638 = vmatprep.subr.mxu0 0.0
    %639 = vmatpush1.xpose.msra.mxu0 %v634
    %640 = vmatprep.subr.mxu0 0.0
    %641 = vmatpush1.xpose.msra.mxu0 0.0
    %642 = vmatprep.subr.mxu0 0.0
    %643 = vmatpush1.xpose.msra.mxu0 0.0
    %644 = vmatprep.subr.mxu0 0.0
    %645 = vmatpush1.xpose.msra.mxu0 0.0
    %646 = vmatprep.subr.mxu0 0.0
    %647 = vmatpush1.xpose.msra.mxu0 0.0
    %648 = vmatprep.subr.mxu0 0.0
    %649 = vmatpush1.xpose.msra.mxu0 0.0
    %650 = vmatprep.subr.mxu0 0.0
    %651 = vmatpush1.xpose.msra.mxu0 0.0
    %652 = vmatprep.subr.mxu0 0.0
    %653 = vmatpush1.xpose.msra.mxu0 0.0
    %654 = vmatprep.subr.mxu0 0.0
    %655 = vmatpush1.xpose.msra.mxu0 0.0
    %656 = vmatprep.subr.mxu0 0.0
    %657 = vmatpush1.xpose.msra.mxu0 0.0
    %658 = vmatprep.subr.mxu0 0.0
    %659 = vmatpush1.xpose.msra.mxu0 0.0
    %660 = vmatprep.subr.mxu0 0.0
    %661 = vmatpush1.xpose.msra.mxu0 0.0
    %662 = vmatprep.subr.mxu0 0.0
    %663 = vmatpush1.xpose.msra.mxu0 0.0
    %664 = vmatprep.subr.mxu0 0.0
    %665 = vmatpush1.xpose.msra.mxu0 0.0
    %666 = vmatprep.subr.mxu0 0.0
    %667 = vmatpush1.xpose.msra.mxu0 0.0
    %668 = vmatprep.subr.mxu0 0.0
    %669 = vmatpush1.xpose.msra.mxu0 0.0
    %670 = vmatprep.subr.mxu0 0.0
    %671 = vmatpush1.xpose.msra.mxu0 0.0
    %672 = vmatprep.subr.mxu0 0.0
    %673 = vmatpush1.xpose.msra.mxu0 0.0
    %674 = vmatprep.subr.mxu0 0.0
    %675 = vmatpush1.xpose.msra.mxu0 0.0
    %676 = vmatprep.subr.mxu0 0.0
    %677 = vmatpush1.xpose.msra.mxu0 0.0
    %678 = vmatprep.subr.mxu0 0.0
    %679 = vmatpush1.xpose.msra.mxu0 0.0
    %680 = vmatprep.subr.mxu0 0.0
    %681 = vmatpush1.xpose.msra.mxu0 0.0
    %682 = vmatprep.subr.mxu0 0.0
    %683 = vmatpush1.xpose.msra.mxu0 0.0
    %684 = vmatprep.subr.mxu0 0.0
    %685 = vmatpush1.xpose.msra.mxu0 0.0
    %686 = vmatprep.subr.mxu0 0.0
    %687 = vmatpush1.xpose.msra.mxu0 0.0
    %688 = vmatprep.subr.mxu0 0.0
    %689 = vmatpush1.xpose.msra.mxu0 0.0
    %690 = vmatprep.subr.mxu0 0.0
    %691 = vmatpush1.xpose.msra.mxu0 0.0
    %692 = vmatprep.subr.mxu0 0.0
    %693 = vmatpush1.xpose.msra.mxu0 0.0
    %694 = vmatprep.subr.mxu0 0.0
    %695 = vmatpush1.xpose.msra.mxu0 0.0
    %696 = vmatprep.subr.mxu0 0.0
    %697 = vmatpush1.xpose.msra.mxu0 0.0
    %698 = vmatprep.subr.mxu0 0.0
    %699 = vmatpush1.xpose.msra.mxu0 0.0
    %700 = vmatprep.mubr.f32.mxu0 0.0
    %701 = vmatmul.mubr.f32.gmra.mrb[0].mxu0 %v628
    %v702 = vpop.f32.mrb[0].mxu0
    %v703 = vadd.f32 %v160, %v702
    %v704 = vpop.f32.mrb[0].mxu0
    %705 = vmatprep.mubr.f32.mxu0 0.0
    %706 = vmatmul.mubr.f32.gmra.mrb[0].mxu0 %v630
    %v707 = vpop.f32.mrb[0].mxu0
    %v708 = vadd.f32 %v161, %v707
    %v709 = vpop.f32.mrb[0].mxu0
    %710 = vdwg.mxu0
    %vm711 = vcmask 130048
    %v712 = vsel %vm711, %v454, -inf
    %713 = vmax.xlane.f32.xlu0 %v712
    %v714 = vpop.xlane.xlu0 %713
    %v715 = vsel %vm711, %v459, -inf
    %716 = vmax.xlane.f32.xlu0 %v715
    %v717 = vpop.xlane.xlu0 %716
    %v718 = vsel %vm711, %v537, -inf
    %719 = vmax.xlane.f32.xlu0 %v718
    %v720 = vpop.xlane.xlu0 %719
    %v721 = vsel %vm711, %v542, -inf
    %722 = vmax.xlane.f32.xlu0 %v721
    %v723 = vpop.xlane.xlu0 %722
    %v724 = vsel %vm711, %v620, -inf
    %725 = vmax.xlane.f32.xlu0 %v724
    %v726 = vpop.xlane.xlu0 %725
    %v727 = vsel %vm711, %v625, -inf
    %728 = vmax.xlane.f32.xlu0 %v727
    %v729 = vpop.xlane.xlu0 %728
    %v730 = vsel %vm711, %v703, -inf
    %731 = vmax.xlane.f32.xlu0 %v730
    %v732 = vpop.xlane.xlu0 %731
    %v733 = vsel %vm711, %v708, -inf
    %734 = vmax.xlane.f32.xlu0 %v733
    %v735 = vpop.xlane.xlu0 %734
    %v736 = vsub.f32 %v454, %v714
    %v737 = vsub.f32 %v459, %v717
    %v738 = vsub.f32 %v537, %v720
    %v739 = vsub.f32 %v542, %v723
    %v740 = vsub.f32 %v620, %v726
    %v741 = vsub.f32 %v625, %v729
    %v742 = vsub.f32 %v703, %v732
    %v743 = vsub.f32 %v708, %v735
    %v744 = vmul.f32 %v736, 1.442695
    %v745 = vpow.pop %v744
    %v746 = vmul.f32 %v737, 1.442695
    %v747 = vpow.pop %v746
    %v748 = vmul.f32 %v738, 1.442695
    %v749 = vpow.pop %v748
    %v750 = vmul.f32 %v739, 1.442695
    %v751 = vpow.pop %v750
    %v752 = vmul.f32 %v740, 1.442695
    %v753 = vpow.pop %v752
    %v754 = vmul.f32 %v741, 1.442695
    %v755 = vpow.pop %v754
    %v756 = vmul.f32 %v742, 1.442695
    %v757 = vpow.pop %v756
    %v758 = vmul.f32 %v743, 1.442695
    %v759 = vpow.pop %v758
    %v760 = vsel %vm711, %v745, 0.0
    %761 = vadd.xlane.f32.xlu0 %v760
    %v762 = vpop.xlane.xlu0 %761
    %v763 = vsel %vm711, %v747, 0.0
    %764 = vadd.xlane.f32.xlu0 %v763
    %v765 = vpop.xlane.xlu0 %764
    %v766 = vsel %vm711, %v749, 0.0
    %767 = vadd.xlane.f32.xlu0 %v766
    %v768 = vpop.xlane.xlu0 %767
    %v769 = vsel %vm711, %v751, 0.0
    %770 = vadd.xlane.f32.xlu0 %v769
    %v771 = vpop.xlane.xlu0 %770
    %v772 = vsel %vm711, %v753, 0.0
    %773 = vadd.xlane.f32.xlu0 %v772
    %v774 = vpop.xlane.xlu0 %773
    %v775 = vsel %vm711, %v755, 0.0
    %776 = vadd.xlane.f32.xlu0 %v775
    %v777 = vpop.xlane.xlu0 %776
    %v778 = vsel %vm711, %v757, 0.0
    %779 = vadd.xlane.f32.xlu0 %v778
    %v780 = vpop.xlane.xlu0 %779
    %v781 = vsel %vm711, %v759, 0.0
    %782 = vadd.xlane.f32.xlu0 %v781
    %v783 = vpop.xlane.xlu0 %782
    %v784 = vrcp.pop %v762
    %v785 = vrcp.pop %v765
    %v786 = vrcp.pop %v768
    %v787 = vrcp.pop %v771
    %v788 = vrcp.pop %v774
    %v789 = vrcp.pop %v777
    %v790 = vrcp.pop %v780
    %v791 = vrcp.pop %v783
    %v792 = vmul.f32 %v745, %v784
    %v793 = vmul.f32 %v747, %v785
    %v794 = vmul.f32 %v749, %v786
    %v795 = vmul.f32 %v751, %v787
    %v796 = vmul.f32 %v753, %v788
    %v797 = vmul.f32 %v755, %v789
    %v798 = vmul.f32 %v757, %v790
    %v799 = vmul.f32 %v759, %v791
    %v801 = vsel %vm711, %v792, 0
    %v804 = vsel %vm711, %v793, 0
    %806 = vmatprep.subr.mxu0 0.0
    %807 = vmatpush1.msra.mxu0 %v322
    %808 = vmatprep.subr.mxu0 0.0
    %809 = vmatpush1.msra.mxu0 %v327
    %810 = vmatprep.subr.mxu0 0.0
    %811 = vmatpush1.msra.mxu0 0.0
    %812 = vmatprep.subr.mxu0 0.0
    %813 = vmatpush1.msra.mxu0 0.0
    %814 = vmatprep.subr.mxu0 0.0
    %815 = vmatpush1.msra.mxu0 0.0
    %816 = vmatprep.subr.mxu0 0.0
    %817 = vmatpush1.msra.mxu0 0.0
    %818 = vmatprep.subr.mxu0 0.0
    %819 = vmatpush1.msra.mxu0 0.0
    %820 = vmatprep.subr.mxu0 0.0
    %821 = vmatpush1.msra.mxu0 0.0
    %822 = vmatprep.subr.mxu0 0.0
    %823 = vmatpush1.msra.mxu0 0.0
    %824 = vmatprep.subr.mxu0 0.0
    %825 = vmatpush1.msra.mxu0 0.0
    %826 = vmatprep.subr.mxu0 0.0
    %827 = vmatpush1.msra.mxu0 0.0
    %828 = vmatprep.subr.mxu0 0.0
    %829 = vmatpush1.msra.mxu0 0.0
    %830 = vmatprep.subr.mxu0 0.0
    %831 = vmatpush1.msra.mxu0 0.0
    %832 = vmatprep.subr.mxu0 0.0
    %833 = vmatpush1.msra.mxu0 0.0
    %834 = vmatprep.subr.mxu0 0.0
    %835 = vmatpush1.msra.mxu0 0.0
    %836 = vmatprep.subr.mxu0 0.0
    %837 = vmatpush1.msra.mxu0 0.0
    %838 = vmatprep.subr.mxu0 0.0
    %839 = vmatpush1.msra.mxu0 0.0
    %840 = vmatprep.subr.mxu0 0.0
    %841 = vmatpush1.msra.mxu0 0.0
    %842 = vmatprep.subr.mxu0 0.0
    %843 = vmatpush1.msra.mxu0 0.0
    %844 = vmatprep.subr.mxu0 0.0
    %845 = vmatpush1.msra.mxu0 0.0
    %846 = vmatprep.subr.mxu0 0.0
    %847 = vmatpush1.msra.mxu0 0.0
    %848 = vmatprep.subr.mxu0 0.0
    %849 = vmatpush1.msra.mxu0 0.0
    %850 = vmatprep.subr.mxu0 0.0
    %851 = vmatpush1.msra.mxu0 0.0
    %852 = vmatprep.subr.mxu0 0.0
    %853 = vmatpush1.msra.mxu0 0.0
    %854 = vmatprep.subr.mxu0 0.0
    %855 = vmatpush1.msra.mxu0 0.0
    %856 = vmatprep.subr.mxu0 0.0
    %857 = vmatpush1.msra.mxu0 0.0
    %858 = vmatprep.subr.mxu0 0.0
    %859 = vmatpush1.msra.mxu0 0.0
    %860 = vmatprep.subr.mxu0 0.0
    %861 = vmatpush1.msra.mxu0 0.0
    %862 = vmatprep.subr.mxu0 0.0
    %863 = vmatpush1.msra.mxu0 0.0
    %864 = vmatprep.subr.mxu0 0.0
    %865 = vmatpush1.msra.mxu0 0.0
    %866 = vmatprep.subr.mxu0 0.0
    %867 = vmatpush1.msra.mxu0 0.0
    %868 = vmatprep.subr.mxu0 0.0
    %869 = vmatpush1.msra.mxu0 0.0
    %870 = vmatprep.mubr.f32.mxu0 0.0
    %871 = vmatmul.mubr.f32.gmra.mrb[0].mxu0 %v801
    %v872 = vpop.f32.mrb[0].mxu0
    %v873 = vadd.f32 0.0, %v872
    %v874 = vpop.f32.mrb[0].mxu0
    %875 = vmatprep.mubr.f32.mxu0 0.0
    %876 = vmatmul.mubr.f32.gmra.mrb[0].mxu0 %v804
    %v877 = vpop.f32.mrb[0].mxu0
    %v878 = vadd.f32 0.0, %v877
    %v879 = vpop.f32.mrb[0].mxu0
    %880 = vdwg.mxu0
    %v882 = vsel %vm711, %v794, 0
    %v885 = vsel %vm711, %v795, 0
    %887 = vmatprep.subr.mxu0 0.0
    %888 = vmatpush1.msra.mxu0 %v361
    %889 = vmatprep.subr.mxu0 0.0
    %890 = vmatpush1.msra.mxu0 %v363
    %891 = vmatprep.subr.mxu0 0.0
    %892 = vmatpush1.msra.mxu0 0.0
    %893 = vmatprep.subr.mxu0 0.0
    %894 = vmatpush1.msra.mxu0 0.0
    %895 = vmatprep.subr.mxu0 0.0
    %896 = vmatpush1.msra.mxu0 0.0
    %897 = vmatprep.subr.mxu0 0.0
    %898 = vmatpush1.msra.mxu0 0.0
    %899 = vmatprep.subr.mxu0 0.0
    %900 = vmatpush1.msra.mxu0 0.0
    %901 = vmatprep.subr.mxu0 0.0
    %902 = vmatpush1.msra.mxu0 0.0
    %903 = vmatprep.subr.mxu0 0.0
    %904 = vmatpush1.msra.mxu0 0.0
    %905 = vmatprep.subr.mxu0 0.0
    %906 = vmatpush1.msra.mxu0 0.0
    %907 = vmatprep.subr.mxu0 0.0
    %908 = vmatpush1.msra.mxu0 0.0
    %909 = vmatprep.subr.mxu0 0.0
    %910 = vmatpush1.msra.mxu0 0.0
    %911 = vmatprep.subr.mxu0 0.0
    %912 = vmatpush1.msra.mxu0 0.0
    %913 = vmatprep.subr.mxu0 0.0
    %914 = vmatpush1.msra.mxu0 0.0
    %915 = vmatprep.subr.mxu0 0.0
    %916 = vmatpush1.msra.mxu0 0.0
    %917 = vmatprep.subr.mxu0 0.0
    %918 = vmatpush1.msra.mxu0 0.0
    %919 = vmatprep.subr.mxu0 0.0
    %920 = vmatpush1.msra.mxu0 0.0
    %921 = vmatprep.subr.mxu0 0.0
    %922 = vmatpush1.msra.mxu0 0.0
    %923 = vmatprep.subr.mxu0 0.0
    %924 = vmatpush1.msra.mxu0 0.0
    %925 = vmatprep.subr.mxu0 0.0
    %926 = vmatpush1.msra.mxu0 0.0
    %927 = vmatprep.subr.mxu0 0.0
    %928 = vmatpush1.msra.mxu0 0.0
    %929 = vmatprep.subr.mxu0 0.0
    %930 = vmatpush1.msra.mxu0 0.0
    %931 = vmatprep.subr.mxu0 0.0
    %932 = vmatpush1.msra.mxu0 0.0
    %933 = vmatprep.subr.mxu0 0.0
    %934 = vmatpush1.msra.mxu0 0.0
    %935 = vmatprep.subr.mxu0 0.0
    %936 = vmatpush1.msra.mxu0 0.0
    %937 = vmatprep.subr.mxu0 0.0
    %938 = vmatpush1.msra.mxu0 0.0
    %939 = vmatprep.subr.mxu0 0.0
    %940 = vmatpush1.msra.mxu0 0.0
    %941 = vmatprep.subr.mxu0 0.0
    %942 = vmatpush1.msra.mxu0 0.0
    %943 = vmatprep.subr.mxu0 0.0
    %944 = vmatpush1.msra.mxu0 0.0
    %945 = vmatprep.subr.mxu0 0.0
    %946 = vmatpush1.msra.mxu0 0.0
    %947 = vmatprep.subr.mxu0 0.0
    %948 = vmatpush1.msra.mxu0 0.0
    %949 = vmatprep.subr.mxu0 0.0
    %950 = vmatpush1.msra.mxu0 0.0
    %951 = vmatprep.mubr.f32.mxu0 0.0
    %952 = vmatmul.mubr.f32.gmra.mrb[0].mxu0 %v882
    %v953 = vpop.f32.mrb[0].mxu0
    %v954 = vadd.f32 0.0, %v953
    %v955 = vpop.f32.mrb[0].mxu0
    %956 = vmatprep.mubr.f32.mxu0 0.0
    %957 = vmatmul.mubr.f32.gmra.mrb[0].mxu0 %v885
    %v958 = vpop.f32.mrb[0].mxu0
    %v959 = vadd.f32 0.0, %v958
    %v960 = vpop.f32.mrb[0].mxu0
    %961 = vdwg.mxu0
    %v963 = vsel %vm711, %v796, 0
    %v966 = vsel %vm711, %v797, 0
    %968 = vmatprep.subr.mxu0 0.0
    %969 = vmatpush1.msra.mxu0 %v367
    %970 = vmatprep.subr.mxu0 0.0
    %971 = vmatpush1.msra.mxu0 %v369
    %972 = vmatprep.subr.mxu0 0.0
    %973 = vmatpush1.msra.mxu0 0.0
    %974 = vmatprep.subr.mxu0 0.0
    %975 = vmatpush1.msra.mxu0 0.0
    %976 = vmatprep.subr.mxu0 0.0
    %977 = vmatpush1.msra.mxu0 0.0
    %978 = vmatprep.subr.mxu0 0.0
    %979 = vmatpush1.msra.mxu0 0.0
    %980 = vmatprep.subr.mxu0 0.0
    %981 = vmatpush1.msra.mxu0 0.0
    %982 = vmatprep.subr.mxu0 0.0
    %983 = vmatpush1.msra.mxu0 0.0
    %984 = vmatprep.subr.mxu0 0.0
    %985 = vmatpush1.msra.mxu0 0.0
    %986 = vmatprep.subr.mxu0 0.0
    %987 = vmatpush1.msra.mxu0 0.0
    %988 = vmatprep.subr.mxu0 0.0
    %989 = vmatpush1.msra.mxu0 0.0
    %990 = vmatprep.subr.mxu0 0.0
    %991 = vmatpush1.msra.mxu0 0.0
    %992 = vmatprep.subr.mxu0 0.0
    %993 = vmatpush1.msra.mxu0 0.0
    %994 = vmatprep.subr.mxu0 0.0
    %995 = vmatpush1.msra.mxu0 0.0
    %996 = vmatprep.subr.mxu0 0.0
    %997 = vmatpush1.msra.mxu0 0.0
    %998 = vmatprep.subr.mxu0 0.0
    %999 = vmatpush1.msra.mxu0 0.0
    %1000 = vmatprep.subr.mxu0 0.0
    %1001 = vmatpush1.msra.mxu0 0.0
    %1002 = vmatprep.subr.mxu0 0.0
    %1003 = vmatpush1.msra.mxu0 0.0
    %1004 = vmatprep.subr.mxu0 0.0
    %1005 = vmatpush1.msra.mxu0 0.0
    %1006 = vmatprep.subr.mxu0 0.0
    %1007 = vmatpush1.msra.mxu0 0.0
    %1008 = vmatprep.subr.mxu0 0.0
    %1009 = vmatpush1.msra.mxu0 0.0
    %1010 = vmatprep.subr.mxu0 0.0
    %1011 = vmatpush1.msra.mxu0 0.0
    %1012 = vmatprep.subr.mxu0 0.0
    %1013 = vmatpush1.msra.mxu0 0.0
    %1014 = vmatprep.subr.mxu0 0.0
    %1015 = vmatpush1.msra.mxu0 0.0
    %1016 = vmatprep.subr.mxu0 0.0
    %1017 = vmatpush1.msra.mxu0 0.0
    %1018 = vmatprep.subr.mxu0 0.0
    %1019 = vmatpush1.msra.mxu0 0.0
    %1020 = vmatprep.subr.mxu0 0.0
    %1021 = vmatpush1.msra.mxu0 0.0
    %1022 = vmatprep.subr.mxu0 0.0
    %1023 = vmatpush1.msra.mxu0 0.0
    %1024 = vmatprep.subr.mxu0 0.0
    %1025 = vmatpush1.msra.mxu0 0.0
    %1026 = vmatprep.subr.mxu0 0.0
    %1027 = vmatpush1.msra.mxu0 0.0
    %1028 = vmatprep.subr.mxu0 0.0
    %1029 = vmatpush1.msra.mxu0 0.0
    %1030 = vmatprep.subr.mxu0 0.0
    %1031 = vmatpush1.msra.mxu0 0.0
    %1032 = vmatprep.mubr.f32.mxu0 0.0
    %1033 = vmatmul.mubr.f32.gmra.mrb[0].mxu0 %v963
    %v1034 = vpop.f32.mrb[0].mxu0
    %v1035 = vadd.f32 0.0, %v1034
    %v1036 = vpop.f32.mrb[0].mxu0
    %1037 = vmatprep.mubr.f32.mxu0 0.0
    %1038 = vmatmul.mubr.f32.gmra.mrb[0].mxu0 %v966
    %v1039 = vpop.f32.mrb[0].mxu0
    %v1040 = vadd.f32 0.0, %v1039
    %v1041 = vpop.f32.mrb[0].mxu0
    %1042 = vdwg.mxu0
    %v1044 = vsel %vm711, %v798, 0
    %v1047 = vsel %vm711, %v799, 0
    %1049 = vmatprep.subr.mxu0 0.0
    %1050 = vmatpush1.msra.mxu0 %v373
    %1051 = vmatprep.subr.mxu0 0.0
    %1052 = vmatpush1.msra.mxu0 %v375
    %1053 = vmatprep.subr.mxu0 0.0
    %1054 = vmatpush1.msra.mxu0 0.0
    %1055 = vmatprep.subr.mxu0 0.0
    %1056 = vmatpush1.msra.mxu0 0.0
    %1057 = vmatprep.subr.mxu0 0.0
    %1058 = vmatpush1.msra.mxu0 0.0
    %1059 = vmatprep.subr.mxu0 0.0
    %1060 = vmatpush1.msra.mxu0 0.0
    %1061 = vmatprep.subr.mxu0 0.0
    %1062 = vmatpush1.msra.mxu0 0.0
    %1063 = vmatprep.subr.mxu0 0.0
    %1064 = vmatpush1.msra.mxu0 0.0
    %1065 = vmatprep.subr.mxu0 0.0
    %1066 = vmatpush1.msra.mxu0 0.0
    %1067 = vmatprep.subr.mxu0 0.0
    %1068 = vmatpush1.msra.mxu0 0.0
    %1069 = vmatprep.subr.mxu0 0.0
    %1070 = vmatpush1.msra.mxu0 0.0
    %1071 = vmatprep.subr.mxu0 0.0
    %1072 = vmatpush1.msra.mxu0 0.0
    %1073 = vmatprep.subr.mxu0 0.0
    %1074 = vmatpush1.msra.mxu0 0.0
    %1075 = vmatprep.subr.mxu0 0.0
    %1076 = vmatpush1.msra.mxu0 0.0
    %1077 = vmatprep.subr.mxu0 0.0
    %1078 = vmatpush1.msra.mxu0 0.0
    %1079 = vmatprep.subr.mxu0 0.0
    %1080 = vmatpush1.msra.mxu0 0.0
    %1081 = vmatprep.subr.mxu0 0.0
    %1082 = vmatpush1.msra.mxu0 0.0
    %1083 = vmatprep.subr.mxu0 0.0
    %1084 = vmatpush1.msra.mxu0 0.0
    %1085 = vmatprep.subr.mxu0 0.0
    %1086 = vmatpush1.msra.mxu0 0.0
    %1087 = vmatprep.subr.mxu0 0.0
    %1088 = vmatpush1.msra.mxu0 0.0
    %1089 = vmatprep.subr.mxu0 0.0
    %1090 = vmatpush1.msra.mxu0 0.0
    %1091 = vmatprep.subr.mxu0 0.0
    %1092 = vmatpush1.msra.mxu0 0.0
    %1093 = vmatprep.subr.mxu0 0.0
    %1094 = vmatpush1.msra.mxu0 0.0
    %1095 = vmatprep.subr.mxu0 0.0
    %1096 = vmatpush1.msra.mxu0 0.0
    %1097 = vmatprep.subr.mxu0 0.0
    %1098 = vmatpush1.msra.mxu0 0.0
    %1099 = vmatprep.subr.mxu0 0.0
    %1100 = vmatpush1.msra.mxu0 0.0
    %1101 = vmatprep.subr.mxu0 0.0
    %1102 = vmatpush1.msra.mxu0 0.0
    %1103 = vmatprep.subr.mxu0 0.0
    %1104 = vmatpush1.msra.mxu0 0.0
    %1105 = vmatprep.subr.mxu0 0.0
    %1106 = vmatpush1.msra.mxu0 0.0
    %1107 = vmatprep.subr.mxu0 0.0
    %1108 = vmatpush1.msra.mxu0 0.0
    %1109 = vmatprep.subr.mxu0 0.0
    %1110 = vmatpush1.msra.mxu0 0.0
    %1111 = vmatprep.subr.mxu0 0.0
    %1112 = vmatpush1.msra.mxu0 0.0
    %1113 = vmatprep.mubr.f32.mxu0 0.0
    %1114 = vmatmul.mubr.f32.gmra.mrb[0].mxu0 %v1044
    %v1115 = vpop.f32.mrb[0].mxu0
    %v1116 = vadd.f32 0.0, %v1115
    %v1117 = vpop.f32.mrb[0].mxu0
    %1118 = vmatprep.mubr.f32.mxu0 0.0
    %1119 = vmatmul.mubr.f32.gmra.mrb[0].mxu0 %v1047
    %v1120 = vpop.f32.mrb[0].mxu0
    %v1121 = vadd.f32 0.0, %v1120
    %v1122 = vpop.f32.mrb[0].mxu0
    %1123 = vdwg.mxu0
    %1126 = vrot.lane.b32.xlu0 %v954, 32
    %v1127 = vpop.permute.xlu0 %1126
    %1128 = vrot.lane.b32.xlu0 %v959, 32
    %v1129 = vpop.permute.xlu0 %1128
    %1134 = vrot.lane.b32.xlu0 %v1035, 64
    %v1135 = vpop.permute.xlu0 %1134
    %1136 = vrot.lane.b32.xlu0 %v1040, 64
    %v1137 = vpop.permute.xlu0 %1136
    %1142 = vrot.lane.b32.xlu0 %v1116, 96
    %v1143 = vpop.permute.xlu0 %1142
    %1144 = vrot.lane.b32.xlu0 %v1121, 96
    %v1145 = vpop.permute.xlu0 %1144
    %v1148 = vsel %vm378, %v873, %v1127
    %v1149 = vsel %vm378, %v878, %v1129
    %vm1150 = vcmask 523264
    %v1151 = vsel %vm1150, %v1148, %v1135
    %v1152 = vsel %vm1150, %v1149, %v1137
    %vm1153 = vcmask 785408
    %v1154 = vsel %vm1153, %v1151, %v1143
    %v1155 = vsel %vm1153, %v1152, %v1145
    %1156 = vmatprep.subr.mxu0 0.0
    %1157 = vmatpush1.msra.mxu0 %v121
    %1158 = vmatprep.subr.mxu0 0.0
    %1159 = vmatpush1.msra.mxu0 %v122
    %1160 = vmatprep.subr.mxu0 0.0
    %1161 = vmatpush1.msra.mxu0 %v123
    %1162 = vmatprep.subr.mxu0 0.0
    %1163 = vmatpush1.msra.mxu0 %v124
    %1164 = vmatprep.subr.mxu0 0.0
    %1165 = vmatpush1.msra.mxu0 %v125
    %1166 = vmatprep.subr.mxu0 0.0
    %1167 = vmatpush1.msra.mxu0 %v126
    %1168 = vmatprep.subr.mxu0 0.0
    %1169 = vmatpush1.msra.mxu0 %v127
    %1170 = vmatprep.subr.mxu0 0.0
    %1171 = vmatpush1.msra.mxu0 %v128
    %1172 = vmatprep.subr.mxu0 0.0
    %1173 = vmatpush1.msra.mxu0 %v129
    %1174 = vmatprep.subr.mxu0 0.0
    %1175 = vmatpush1.msra.mxu0 %v130
    %1176 = vmatprep.subr.mxu0 0.0
    %1177 = vmatpush1.msra.mxu0 %v131
    %1178 = vmatprep.subr.mxu0 0.0
    %1179 = vmatpush1.msra.mxu0 %v132
    %1180 = vmatprep.subr.mxu0 0.0
    %1181 = vmatpush1.msra.mxu0 %v133
    %1182 = vmatprep.subr.mxu0 0.0
    %1183 = vmatpush1.msra.mxu0 %v134
    %1184 = vmatprep.subr.mxu0 0.0
    %1185 = vmatpush1.msra.mxu0 %v135
    %1186 = vmatprep.subr.mxu0 0.0
    %1187 = vmatpush1.msra.mxu0 %v136
    %1188 = vmatprep.subr.mxu0 0.0
    %1189 = vmatpush1.msra.mxu0 0.0
    %1190 = vmatprep.subr.mxu0 0.0
    %1191 = vmatpush1.msra.mxu0 0.0
    %1192 = vmatprep.subr.mxu0 0.0
    %1193 = vmatpush1.msra.mxu0 0.0
    %1194 = vmatprep.subr.mxu0 0.0
    %1195 = vmatpush1.msra.mxu0 0.0
    %1196 = vmatprep.subr.mxu0 0.0
    %1197 = vmatpush1.msra.mxu0 0.0
    %1198 = vmatprep.subr.mxu0 0.0
    %1199 = vmatpush1.msra.mxu0 0.0
    %1200 = vmatprep.subr.mxu0 0.0
    %1201 = vmatpush1.msra.mxu0 0.0
    %1202 = vmatprep.subr.mxu0 0.0
    %1203 = vmatpush1.msra.mxu0 0.0
    %1204 = vmatprep.subr.mxu0 0.0
    %1205 = vmatpush1.msra.mxu0 0.0
    %1206 = vmatprep.subr.mxu0 0.0
    %1207 = vmatpush1.msra.mxu0 0.0
    %1208 = vmatprep.subr.mxu0 0.0
    %1209 = vmatpush1.msra.mxu0 0.0
    %1210 = vmatprep.subr.mxu0 0.0
    %1211 = vmatpush1.msra.mxu0 0.0
    %1212 = vmatprep.subr.mxu0 0.0
    %1213 = vmatpush1.msra.mxu0 0.0
    %1214 = vmatprep.subr.mxu0 0.0
    %1215 = vmatpush1.msra.mxu0 0.0
    %1216 = vmatprep.subr.mxu0 0.0
    %1217 = vmatpush1.msra.mxu0 0.0
    %1218 = vmatprep.subr.mxu0 0.0
    %1219 = vmatpush1.msra.mxu0 0.0
    %1220 = vmatprep.mubr.f32.mxu0 0.0
    %1221 = vmatmul.mubr.f32.gmra.mrb[0].mxu0 %v1154
    %v1222 = vpop.f32.mrb[0].mxu0
    %v1223 = vadd.f32 %v154, %v1222
    %v1224 = vpop.f32.mrb[0].mxu0
    %1225 = vmatprep.mubr.f32.mxu0 0.0
    %1226 = vmatmul.mubr.f32.gmra.mrb[0].mxu0 %v1155
    %v1227 = vpop.f32.mrb[0].mxu0
    %v1228 = vadd.f32 %v154, %v1227
    %v1229 = vpop.f32.mrb[0].mxu0
    %1230 = vdwg.mxu0
    %v1231 = vadd.f32 %v71, %v1223
    %v1232 = vadd.f32 %v72, %v1228
    %1233 = vadd.xlane.f32.xlu0 %v1231
    %v1234 = vpop.xlane.xlu0 %1233
    %1235 = vadd.xlane.f32.xlu0 %v1232
    %v1236 = vpop.xlane.xlu0 %1235
    %v1237 = vrcp.pop 128.0
    %v1238 = vmul.f32 %v1234, %v1237
    %v1239 = vmul.f32 %v1236, %v1237
    %v1240 = vsub.f32 %v1231, %v1238
    %v1241 = vsub.f32 %v1232, %v1239
    %v1242 = vmul.f32 %v1240, %v1240
    %v1243 = vmul.f32 %v1241, %v1241
    %1244 = vadd.xlane.f32.xlu0 %v1242
    %v1245 = vpop.xlane.xlu0 %1244
    %1246 = vadd.xlane.f32.xlu0 %v1243
    %v1247 = vpop.xlane.xlu0 %1246
    %v1248 = vmul.f32 %v1245, %v1237
    %v1249 = vmul.f32 %v1247, %v1237
    %v1250 = vadd.f32 %v1248, 1e-05
    %v1251 = vadd.f32 %v1249, 1e-05
    %v1252 = vrsqrt.pop %v1250
    %v1253 = vrsqrt.pop %v1251
    %v1254 = vmul.f32 %v1240, %v1252
    %v1255 = vmul.f32 %v1241, %v1253
    %v1256 = vmul.f32 %v1254, %v156
    %v1257 = vmul.f32 %v1255, %v156
    %v1258 = vadd.f32 %v1256, %v157
    %v1259 = vadd.f32 %v1257, %v157
    %1260 = vmatprep.subr.mxu0 0.0
    %1261 = vmatpush1.msra.mxu0 %v137
    %1262 = vmatprep.subr.mxu0 0.0
    %1263 = vmatpush1.msra.mxu0 %v138
    %1264 = vmatprep.subr.mxu0 0.0
    %1265 = vmatpush1.msra.mxu0 %v139
    %1266 = vmatprep.subr.mxu0 0.0
    %1267 = vmatpush1.msra.mxu0 %v140
    %1268 = vmatprep.subr.mxu0 0.0
    %1269 = vmatpush1.msra.mxu0 %v141
    %1270 = vmatprep.subr.mxu0 0.0
    %1271 = vmatpush1.msra.mxu0 %v142
    %1272 = vmatprep.subr.mxu0 0.0
    %1273 = vmatpush1.msra.mxu0 %v143
    %1274 = vmatprep.subr.mxu0 0.0
    %1275 = vmatpush1.msra.mxu0 %v144
    %1276 = vmatprep.subr.mxu0 0.0
    %1277 = vmatpush1.msra.mxu0 %v145
    %1278 = vmatprep.subr.mxu0 0.0
    %1279 = vmatpush1.msra.mxu0 %v146
    %1280 = vmatprep.subr.mxu0 0.0
    %1281 = vmatpush1.msra.mxu0 %v147
    %1282 = vmatprep.subr.mxu0 0.0
    %1283 = vmatpush1.msra.mxu0 %v148
    %1284 = vmatprep.subr.mxu0 0.0
    %1285 = vmatpush1.msra.mxu0 %v149
    %1286 = vmatprep.subr.mxu0 0.0
    %1287 = vmatpush1.msra.mxu0 %v150
    %1288 = vmatprep.subr.mxu0 0.0
    %1289 = vmatpush1.msra.mxu0 %v151
    %1290 = vmatprep.subr.mxu0 0.0
    %1291 = vmatpush1.msra.mxu0 %v152
    %1292 = vmatprep.subr.mxu0 0.0
    %1293 = vmatpush1.msra.mxu0 0.0
    %1294 = vmatprep.subr.mxu0 0.0
    %1295 = vmatpush1.msra.mxu0 0.0
    %1296 = vmatprep.subr.mxu0 0.0
    %1297 = vmatpush1.msra.mxu0 0.0
    %1298 = vmatprep.subr.mxu0 0.0
    %1299 = vmatpush1.msra.mxu0 0.0
    %1300 = vmatprep.subr.mxu0 0.0
    %1301 = vmatpush1.msra.mxu0 0.0
    %1302 = vmatprep.subr.mxu0 0.0
    %1303 = vmatpush1.msra.mxu0 0.0
    %1304 = vmatprep.subr.mxu0 0.0
    %1305 = vmatpush1.msra.mxu0 0.0
    %1306 = vmatprep.subr.mxu0 0.0
    %1307 = vmatpush1.msra.mxu0 0.0
    %1308 = vmatprep.subr.mxu0 0.0
    %1309 = vmatpush1.msra.mxu0 0.0
    %1310 = vmatprep.subr.mxu0 0.0
    %1311 = vmatpush1.msra.mxu0 0.0
    %1312 = vmatprep.subr.mxu0 0.0
    %1313 = vmatpush1.msra.mxu0 0.0
    %1314 = vmatprep.subr.mxu0 0.0
    %1315 = vmatpush1.msra.mxu0 0.0
    %1316 = vmatprep.subr.mxu0 0.0
    %1317 = vmatpush1.msra.mxu0 0.0
    %1318 = vmatprep.subr.mxu0 0.0
    %1319 = vmatpush1.msra.mxu0 0.0
    %1320 = vmatprep.subr.mxu0 0.0
    %1321 = vmatpush1.msra.mxu0 0.0
    %1322 = vmatprep.subr.mxu0 0.0
    %1323 = vmatpush1.msra.mxu0 0.0
    %1324 = vmatprep.mubr.f32.mxu0 0.0
    %1325 = vmatmul.mubr.f32.gmra.mrb[0].mxu0 %v1258
    %v1326 = vpop.f32.mrb[0].mxu0
    %v1327 = vadd.f32 %v155, %v1326
    %v1328 = vpop.f32.mrb[0].mxu0
    %1329 = vmatprep.mubr.f32.mxu0 0.0
    %1330 = vmatmul.mubr.f32.gmra.mrb[0].mxu0 %v1259
    %v1331 = vpop.f32.mrb[0].mxu0
    %v1332 = vadd.f32 %v155, %v1331
    %v1333 = vpop.f32.mrb[0].mxu0
    %1334 = vdwg.mxu0
    %v1335 = vadd.f32 %v1258, %v1327
    %v1336 = vadd.f32 %v1259, %v1332
    %1337 = vadd.xlane.f32.xlu0 %v1335
    %v1338 = vpop.xlane.xlu0 %1337
    %1339 = vadd.xlane.f32.xlu0 %v1336
    %v1340 = vpop.xlane.xlu0 %1339
    %v1341 = vmul.f32 %v1338, %v1237
    %v1342 = vmul.f32 %v1340, %v1237
    %v1343 = vsub.f32 %v1335, %v1341
    %v1344 = vsub.f32 %v1336, %v1342
    %v1345 = vmul.f32 %v1343, %v1343
    %v1346 = vmul.f32 %v1344, %v1344
    %1347 = vadd.xlane.f32.xlu0 %v1345
    %v1348 = vpop.xlane.xlu0 %1347
    %1349 = vadd.xlane.f32.xlu0 %v1346
    %v1350 = vpop.xlane.xlu0 %1349
    %v1351 = vmul.f32 %v1348, %v1237
    %v1352 = vmul.f32 %v1350, %v1237
    %v1353 = vadd.f32 %v1351, 1e-05
    %v1354 = vadd.f32 %v1352, 1e-05
    %v1355 = vrsqrt.pop %v1353
    %v1356 = vrsqrt.pop %v1354
    %v1357 = vmul.f32 %v1343, %v1355
    %v1358 = vmul.f32 %v1344, %v1356
    %v1359 = vmul.f32 %v1357, %v158
    %v1360 = vmul.f32 %v1358, %v158
    %v1361 = vadd.f32 %v1359, %v159
    %v1362 = vadd.f32 %v1360, %v159
    %1363 = vst [vmem:[#allocation10] sm:$0xff] %v1361
    %1364 = vst [vmem:[#allocation10 + $0x8] sm:$0xff] %v1362
    // Predicated region
    $region34: #{transformer_block_forward.1} parent=1 // pred_check
      _
    $region35: #{transformer_block_forward.1} parent=1 // pred_check_branch
      %1366 = sbr.rel (0) target = $region37
    $region36: #{transformer_block_forward.1} parent=1 // pred_region
      %s1368 = ssub.s32 256, 256
      %1369 = vsyncadd [#allocation4], %s1368
      %s1370 = sshll.u32 [#allocation10], 4
      %s1371 = int_to_ptr.vmem [resolvable:$true] %s1370
      %1376 = dma.vmem_to_hbm [thread:$0]  %s1371, 256, %s4, [#allocation4], 128, 128, 8
    $region37: #{transformer_block_forward.1} parent=1 // pred_fallthru
      _
    // Predicated region
    $region38: #{transformer_block_forward.1} parent=1 // pred_check
      _
    $region39: #{transformer_block_forward.1} parent=1 // pred_check_branch
      %1378 = sbr.rel (0) target = $region41
    $region40: #{transformer_block_forward.1} parent=1 // pred_region
      %1379 = dma.done [#allocation4], 256
    $region41: #{transformer_block_forward.1} parent=1 // pred_fallthru
      _
    %1380 = vsyncpa [#allocation3], 1
    %1381 = vsyncpa [#allocation6], 1
    %1382 = vsyncpa [#allocation9], 1
    %1383 = vsyncpa [#allocation4], 1

</llo_original>
